<compile_context>
chip_gen: v6e
topology: v6e:2x2x1
jax: 0.10.0
libtpu: 0.0.40
codegen_flags: <defaults>
</compile_context>

<pallas_src>
import jax
import jax.numpy as jnp
from jax.experimental import pallas as pl
from jax.experimental.pallas import tpu as pltpu

EPS = 1.0e-8            # torchbox global EPS
LANES = 128
SUBLANES = 8
CHUNK_ROWS = 512        # in-kernel fold granularity: 512x128 f32 = 256 KiB live
NUM_CORES = 2           # leading "parallel" grid axis; sharded across v7x's 2 TCs
VMEM_LIMIT_BYTES = 28 * 1024 * 1024   # safe on all generations (v7x: 64 MiB/TC)


def _select_block_rows():
    """Generation-aware block height (rows of 128 lanes).

    8192 rows = 4 MiB/block/input (f32) -> 16 MiB double-buffered 2-input
    footprint, made legal everywhere via the explicit vmem_limit_bytes.
    On v5e we drop to 4096 rows (8 MiB footprint) to keep extra headroom.
    """
    kind = ""
    try:
        kind = jax.devices()[0].device_kind.lower()
    except Exception:
        pass
    if "v5 lite" in kind or "v5e" in kind or "v5lite" in kind:
        return 4096
    return 8192


def _make_kernel(rows_total, block_rows, blocks_per_core):
    """Kernel with all static sizes baked in.  Grid is (core, block)."""
    assert block_rows % CHUNK_ROWS == 0
    n_chunks = block_rows // CHUNK_ROWS

    def kernel(p_ref, g_ref, o_ref):
        c = pl.program_id(0)                       # core axis ("parallel")
        i = pl.program_id(1)                       # reduction axis ("arbitrary")
        block_idx = c * blocks_per_core + i        # un-clamped global block id
        rows_valid = rows_total - block_idx * block_rows   # may be <=0 or > block

        # Output block (c, 0) stays resident across the i axis -> use it as the
        # per-core (8,128) accumulator; zero it at the start of each core sweep.
        @pl.when(i == 0)
        def _():
            o_ref[...] = jnp.zeros_like(o_ref)

        def fold(masked):
            # Chunked fold keeps the elementwise temporary <= 256 KiB and folds
            # onto the (8,128) accumulator with pure VALU adds (no per-step
            # cross-lane reduction).
            @pl.loop(0, n_chunks)
            def _(k):
                off = pl.multiple_of(k * CHUNK_ROWS, CHUNK_ROWS)
                p = p_ref[pl.ds(off, CHUNK_ROWS), :].astype(jnp.float32)
                g = g_ref[pl.ds(off, CHUNK_ROWS), :].astype(jnp.float32)
                # S contribution: 2*P*G - P - G == P*(2G - 1) - G
                t = p * (2.0 * g - 1.0) - g
                if masked:
                    # Ragged / padding block: rows at or past rows_total hold
                    # garbage (Pallas does not zero-fill OOB block data).
                    rows_left = rows_valid - off
                    rid = jax.lax.broadcasted_iota(
                        jnp.int32, (CHUNK_ROWS, LANES), 0)
                    t = jnp.where(rid < rows_left, t, 0.0)
                o_ref[...] += jnp.sum(
                    t.reshape(CHUNK_ROWS // SUBLANES, SUBLANES, LANES), axis=0)

        interior = rows_valid >= block_rows        # every row of this block is real

        @pl.when(interior)
        def _():
            fold(masked=False)

        @pl.when(jnp.logical_not(interior))
        def _():
            fold(masked=True)

    return kernel


def iridescent_distance(P, G, block_rows=None):
    """Pallas TPU implementation of Iridescent.forward(P, G) -> scalar f32."""
    assert P.shape == G.shape, "P and G must have identical shapes"
    n = int(P.size)
    assert n > 0

    if block_rows is None:
        block_rows = _select_block_rows()
    block_rows = max(CHUNK_ROWS, (block_rows // CHUNK_ROWS) * CHUNK_ROWS)

    pflat = P.reshape(-1)
    gflat = G.reshape(-1)

    # Padding policy (keeps all big inputs pad-free):
    #   * numel % 128 != 0      -> pad to the next multiple of 128 so the free
    #     2-D (rows,128) reshape is valid.  TODO(synk): a 1-D-block kernel
    #     could avoid this O(N) copy for the rare lane-unaligned case.
    #   * numel < 512*128 (64K) -> pad to one full 512-row block (tiny copy),
    #     which keeps every block shape a clean multiple of (8,128).
    n128 = pl.cdiv(n, LANES) * LANES
    n_pad = max(n128, CHUNK_ROWS * LANES)
    if n_pad != n:
        pflat = jnp.pad(pflat, (0, n_pad - n))
        gflat = jnp.pad(gflat, (0, n_pad - n))

    rows_total = n_pad // LANES                    # >= CHUNK_ROWS
    p2 = pflat.reshape(rows_total, LANES)
    g2 = gflat.reshape(rows_total, LANES)

    # Block height: multiple of CHUNK_ROWS, never larger than the array; the
    # final block may be ragged and is masked in-kernel (no pad to the block
    # boundary).
    block_rows = min(block_rows, (rows_total // CHUNK_ROWS) * CHUNK_ROWS)
    num_blocks = pl.cdiv(rows_total, block_rows)
    blocks_per_core = pl.cdiv(num_blocks, NUM_CORES)

    def in_index_map(c, i):
        # Clamp so grid padding steps (num_blocks not divisible by NUM_CORES)
        # fetch a valid block; their contribution is masked to zero in-kernel.
        return (jnp.minimum(c * blocks_per_core + i, num_blocks - 1), 0)

    kernel = _make_kernel(rows_total, block_rows, blocks_per_core)

    out_bytes = NUM_CORES * SUBLANES * LANES * 4
    cost = pl.CostEstimate(
        flops=6 * n,
        transcendentals=0,
        bytes_accessed=int(p2.size) * p2.dtype.itemsize
        + int(g2.size) * g2.dtype.itemsize
        + out_bytes,
    )

    partials = pl.pallas_call(
        kernel,
        out_shape=jax.ShapeDtypeStruct((NUM_CORES * SUBLANES, LANES), jnp.float32),
        grid_spec=pltpu.PrefetchScalarGridSpec(
            num_scalar_prefetch=0,
            grid=(NUM_CORES, blocks_per_core),
            in_specs=[
                pl.BlockSpec((block_rows, LANES), in_index_map),
                pl.BlockSpec((block_rows, LANES), in_index_map),
            ],
            out_specs=pl.BlockSpec((SUBLANES, LANES), lambda c, i: (c, 0)),
        ),
        compiler_params=pltpu.CompilerParams(
            dimension_semantics=("parallel", "arbitrary"),
            vmem_limit_bytes=VMEM_LIMIT_BYTES,
        ),
        cost_estimate=cost,
    )(p2, g2)

    # Cross-lane + cross-core reduce of the raw partial tiles, then the final
    # ratio.  The denominator n + EPS is folded in Python float64 so EPS is not
    # lost before the (f32, torch-matching) divide.
    s = jnp.sum(partials)
    n_f = float(n)
    return (n_f + s) / (n_f + EPS)


def _iridescent_reference(P, G):
    P = P.astype(jnp.float32)
    G = G.astype(jnp.float32)
    sbo = jnp.sum(P * G)
    sbz = jnp.sum((1.0 - P) * (1.0 - G))
    return (sbo + sbz) / (jnp.sum(P) + jnp.sum(G) - sbo + sbz + EPS)


if __name__ == "__main__":
    key = jax.random.PRNGKey(0)
    kp, kg, kp2, kg2 = jax.random.split(key, 4)

    # Probability-map style inputs (NCHW): lane-aligned path.
    P = jax.random.uniform(kp, (2, 4, 16, 16), dtype=jnp.float32)
    G = (jax.random.uniform(kg, (2, 4, 16, 16), dtype=jnp.float32) > 0.5).astype(
        jnp.float32
    )
    out = jax.block_until_ready(iridescent_distance(P, G))
    ref = jax.block_until_ready(_iridescent_reference(P, G))
    assert jnp.allclose(out, ref, rtol=1e-5, atol=1e-6), (out, ref)

    # Lane-unaligned element count exercises the (tiny) pad path.
    P2 = jax.random.uniform(kp2, (2, 3, 7, 5), dtype=jnp.float32)
    G2 = (jax.random.uniform(kg2, (2, 3, 7, 5), dtype=jnp.float32) > 0.5).astype(
        jnp.float32
    )
    out2 = jax.block_until_ready(iridescent_distance(P2, G2))
    ref2 = jax.block_until_ready(_iridescent_reference(P2, G2))
    assert jnp.allclose(out2, ref2, rtol=1e-5, atol=1e-6), (out2, ref2)

    print("KERNEL_OK")
</pallas_src>

<mosaic_0001>
module attributes {stable_mosaic.version = 11 : i64} {
  func.func @kernel(%arg0: i32, %arg1: i32, %arg2: memref<512x128xf32, #tpu.memory_space<vmem>>, %arg3: memref<512x128xf32, #tpu.memory_space<vmem>>, %arg4: memref<8x128xf32, #tpu.memory_space<vmem>>) attributes {dimension_semantics = [#tpu.dimension_semantics<parallel>, #tpu.dimension_semantics<arbitrary>], iteration_bounds = array<i64: 2, 1>, scalar_prefetch = 0 : i64, scratch_operands = 0 : i64, tpu.core_type = #tpu.core_type<tc>, window_params = [{transform_indices = @transform_0, window_bounds = array<i64: 512, 128>}, {transform_indices = @transform_1, window_bounds = array<i64: 512, 128>}, {transform_indices = @transform_2, window_bounds = array<i64: 8, 128>}]} {
    %c1_i32 = arith.constant 1 : i32
    %0 = arith.muli %arg0, %c1_i32 : i32
    %1 = arith.addi %0, %arg1 : i32
    %c512_i32 = arith.constant 512 : i32
    %2 = arith.muli %1, %c512_i32 : i32
    %c512_i32_0 = arith.constant 512 : i32
    %3 = arith.subi %c512_i32_0, %2 : i32
    %c0_i32 = arith.constant 0 : i32
    %4 = arith.cmpi eq, %arg1, %c0_i32 : i32
    %5 = arith.extui %4 : i1 to i32
    %c0_i32_1 = arith.constant 0 : i32
    %6 = arith.cmpi ne, %5, %c0_i32_1 : i32
    scf.if %6 {
      %cst = arith.constant 0.000000e+00 : f32
      %13 = vector.broadcast %cst : f32 to vector<8x128xf32>
      %c0 = arith.constant 0 : index
      %c0_5 = arith.constant 0 : index
      %14 = vector.load %arg4[%c0, %c0_5] : memref<8x128xf32, #tpu.memory_space<vmem>>, vector<8x128xf32>
      tpu.vector_store %arg4[%c0, %c0_5], %13 {strides = array<i32>} : memref<8x128xf32, #tpu.memory_space<vmem>>, vector<8x128xf32>,
    } else {
    }
    %c512_i32_2 = arith.constant 512 : i32
    %7 = arith.cmpi sge, %3, %c512_i32_2 : i32
    %8 = arith.extui %7 : i1 to i32
    %c0_i32_3 = arith.constant 0 : i32
    %9 = arith.cmpi ne, %8, %c0_i32_3 : i32
    scf.if %9 {
      %c0_i32_5 = arith.constant 0 : i32
      %c1_i32_6 = arith.constant 1 : i32
      %13 = arith.muli %c0_i32_5, %c1_i32_6 : i32
      %c0_i32_7 = arith.constant 0 : i32
      %14 = arith.addi %c0_i32_7, %13 : i32
      %c512_i32_8 = arith.constant 512 : i32
      %15 = arith.muli %14, %c512_i32_8 : i32
      %16 = tpu.assume_multiple %15, 512 : i32
      %17 = arith.index_cast %16 : i32 to index
      %c0 = arith.constant 0 : index
      %18 = vector.load %arg2[%17, %c0] : memref<512x128xf32, #tpu.memory_space<vmem>>, vector<512x128xf32>
      %19 = arith.index_cast %16 : i32 to index
      %c0_9 = arith.constant 0 : index
      %20 = vector.load %arg3[%19, %c0_9] : memref<512x128xf32, #tpu.memory_space<vmem>>, vector<512x128xf32>
      %cst = arith.constant 2.000000e+00 : f32
      %21 = vector.broadcast %cst : f32 to vector<512x128xf32>
      %22 = arith.mulf %21, %20 : vector<512x128xf32>
      %cst_10 = arith.constant 1.000000e+00 : f32
      %23 = vector.broadcast %cst_10 : f32 to vector<512x128xf32>
      %24 = arith.subf %22, %23 : vector<512x128xf32>
      %25 = arith.mulf %18, %24 : vector<512x128xf32>
      %26 = arith.subf %25, %20 : vector<512x128xf32>
      %c0_11 = arith.constant 0 : index
      %c0_12 = arith.constant 0 : index
      %27 = vector.load %arg4[%c0_11, %c0_12] : memref<8x128xf32, #tpu.memory_space<vmem>>, vector<8x128xf32>
      %28 = vector.shape_cast %26 : vector<512x128xf32> to vector<64x8x128xf32>
      %cst_13 = arith.constant dense<0.000000e+00> : vector<8x128xf32>
      %29 = vector.multi_reduction <add>, %28, %cst_13 [0] : vector<64x8x128xf32> to vector<8x128xf32>
      %30 = arith.addf %27, %29 : vector<8x128xf32>
      %c0_14 = arith.constant 0 : index
      %c0_15 = arith.constant 0 : index
      %31 = vector.load %arg4[%c0_14, %c0_15] : memref<8x128xf32, #tpu.memory_space<vmem>>, vector<8x128xf32>
      tpu.vector_store %arg4[%c0_14, %c0_15], %30 {strides = array<i32>} : memref<8x128xf32, #tpu.memory_space<vmem>>, vector<8x128xf32>,
      %c1_i32_16 = arith.constant 1 : i32
    } else {
    }
    %true = arith.constant true
    %10 = arith.xori %7, %true : i1
    %11 = arith.extui %10 : i1 to i32
    %c0_i32_4 = arith.constant 0 : i32
    %12 = arith.cmpi ne, %11, %c0_i32_4 : i32
    scf.if %12 {
      %c0_i32_5 = arith.constant 0 : i32
      %c1_i32_6 = arith.constant 1 : i32
      %13 = arith.muli %c0_i32_5, %c1_i32_6 : i32
      %c0_i32_7 = arith.constant 0 : i32
      %14 = arith.addi %c0_i32_7, %13 : i32
      %c512_i32_8 = arith.constant 512 : i32
      %15 = arith.muli %14, %c512_i32_8 : i32
      %16 = tpu.assume_multiple %15, 512 : i32
      %17 = arith.index_cast %16 : i32 to index
      %c0 = arith.constant 0 : index
      %18 = vector.load %arg2[%17, %c0] : memref<512x128xf32, #tpu.memory_space<vmem>>, vector<512x128xf32>
      %19 = arith.index_cast %16 : i32 to index
      %c0_9 = arith.constant 0 : index
      %20 = vector.load %arg3[%19, %c0_9] : memref<512x128xf32, #tpu.memory_space<vmem>>, vector<512x128xf32>
      %cst = arith.constant 2.000000e+00 : f32
      %21 = vector.broadcast %cst : f32 to vector<512x128xf32>
      %22 = arith.mulf %21, %20 : vector<512x128xf32>
      %cst_10 = arith.constant 1.000000e+00 : f32
      %23 = vector.broadcast %cst_10 : f32 to vector<512x128xf32>
      %24 = arith.subf %22, %23 : vector<512x128xf32>
      %25 = arith.mulf %18, %24 : vector<512x128xf32>
      %26 = arith.subf %25, %20 : vector<512x128xf32>
      %27 = arith.subi %3, %16 : i32
      %28 = tpu.iota {dimensions = array<i32: 0>} : vector<512x128xi32>
      %29 = vector.broadcast %27 : i32 to vector<512x128xi32>
      %30 = arith.cmpi slt, %28, %29 : vector<512x128xi32>
      %cst_11 = arith.constant 0.000000e+00 : f32
      %31 = vector.broadcast %cst_11 : f32 to vector<512x128xf32>
      %32 = arith.select %30, %26, %31 : vector<512x128xi1>, vector<512x128xf32>
      %c0_12 = arith.constant 0 : index
      %c0_13 = arith.constant 0 : index
      %33 = vector.load %arg4[%c0_12, %c0_13] : memref<8x128xf32, #tpu.memory_space<vmem>>, vector<8x128xf32>
      %34 = vector.shape_cast %32 : vector<512x128xf32> to vector<64x8x128xf32>
      %cst_14 = arith.constant dense<0.000000e+00> : vector<8x128xf32>
      %35 = vector.multi_reduction <add>, %34, %cst_14 [0] : vector<64x8x128xf32> to vector<8x128xf32>
      %36 = arith.addf %33, %35 : vector<8x128xf32>
      %c0_15 = arith.constant 0 : index
      %c0_16 = arith.constant 0 : index
      %37 = vector.load %arg4[%c0_15, %c0_16] : memref<8x128xf32, #tpu.memory_space<vmem>>, vector<8x128xf32>
      tpu.vector_store %arg4[%c0_15, %c0_16], %36 {strides = array<i32>} : memref<8x128xf32, #tpu.memory_space<vmem>>, vector<8x128xf32>,
      %c1_i32_17 = arith.constant 1 : i32
    } else {
    }
    return
  }
  func.func @transform_0(%arg0: i32, %arg1: i32) -> (i32, i32) {
    %c1_i32 = arith.constant 1 : i32
    %0 = arith.muli %arg0, %c1_i32 : i32
    %1 = arith.addi %0, %arg1 : i32
    %c0_i32 = arith.constant 0 : i32
    %2 = arith.minsi %1, %c0_i32 : i32
    %c0_i32_0 = arith.constant 0 : i32
    %c0_i32_1 = arith.constant 0 : i32
    return %2, %c0_i32_0 : i32, i32
  }
  func.func @transform_1(%arg0: i32, %arg1: i32) -> (i32, i32) {
    %c1_i32 = arith.constant 1 : i32
    %0 = arith.muli %arg0, %c1_i32 : i32
    %1 = arith.addi %0, %arg1 : i32
    %c0_i32 = arith.constant 0 : i32
    %2 = arith.minsi %1, %c0_i32 : i32
    %c0_i32_0 = arith.constant 0 : i32
    %c0_i32_1 = arith.constant 0 : i32
    return %2, %c0_i32_0 : i32, i32
  }
  func.func @transform_2(%arg0: i32, %arg1: i32) -> (i32, i32) {
    %c0_i32 = arith.constant 0 : i32
    %c0_i32_0 = arith.constant 0 : i32
    return %arg0, %c0_i32 : i32, i32
  }
}

</mosaic_0001>

<llo_original>
// kernel: tpu_custom_call.1
$region0: #{tpu_custom_call.1}
  #allocation0 [shape = 'u32[]', space=smem, size = 0x4, offset = 0x4, fixed_abs, tag = 'smem constant byte address 0x4 - core index']
  #allocation1 [shape = 'u32[144,128]{1,0:T(1,128)}', space=vmem, size = 0x12000, scoped, tag = 'internal scratch']
  %s0 = inlined_call_operand.hbm [shape: f32[512,128], index: 0, kind: input, shape index: {}]
  %s1 = inlined_call_operand.hbm [shape: f32[512,128], index: 1, kind: input, shape index: {}]
  %s2 = inlined_call_operand.hbm [shape: f32[16,128], index: 2, kind: output, shape index: {}]
  %s3 = sld [smem:[#allocation0]]
  $region61: #{tpu_custom_call.1} parent=0
    _
  %s5 = ssub.s32 1, %s3
  %s6 = scalar_select 0, %s5, %s3
  $region1: #{tpu_custom_call.1} parent=0
    #allocation2 [shape = 'u8[524288]{0}', space=vmem, size = 0x80000, scoped, tag = 'input window, operand 0']
    #allocation3 [shape = 's32[2]{0}', space=sflag, size = 0x8, scoped, tag = 'scoped memory for tpu_custom_call.1']
    #allocation4 [shape = 's32[2]{0}', space=sflag, size = 0x8, scoped, tag = 'scoped memory for tpu_custom_call.1']
    #allocation5 [shape = 'u8[524288]{0}', space=vmem, size = 0x80000, scoped, tag = 'input window, operand 1']
    #allocation6 [shape = 's32[2]{0}', space=sflag, size = 0x8, scoped, tag = 'scoped memory for tpu_custom_call.1']
    #allocation7 [shape = 'u8[8192]{0}', space=vmem, size = 0x2000, scoped, tag = 'output window, operand 0']
    %7 = vsyncpa [#allocation3], 0
    %s8 = scalar_lea.sflag [#allocation3], 1
    %9 = vsyncpa %s8, 0
    %10 = vsyncpa [#allocation6], 0
    %s11 = scalar_lea.sflag [#allocation6], 1
    %12 = vsyncpa %s11, 0
    %13 = vsyncpa [#allocation4], 0
    %s14 = scalar_lea.sflag [#allocation4], 1
    %15 = vsyncpa %s14, 0
    loop: start=0, step=1, limit=4
    $region2: #{tpu_custom_call.1} parent=1 // loop_pre_header
      _
    $region3: #{tpu_custom_call.1} parent=1 // loop_header
      %s17 = sphi 0, %s21
      %p18 = scmp.ge.s32.totalorder %s17, 4
      %s24 = sphi 0, %s36
      %s25 = sphi 0, %s32
      %s26 = sphi 0, %s24
      %s27 = sphi 0, %s25
      %s28 = sphi 0, %s26
      %s29 = sphi 0, %s27
      %s45 = sphi 0, %s47
      %s48 = sphi 0, %s45
      %s49 = sphi 0, %s48
      %s65 = sphi 0, %s49
      %s77 = sphi 0, %s79
      %s80 = sphi 0, %s77
      %s81 = sphi 0, %s80
      %s97 = sphi 0, %s81
      %s103 = sphi 0, %s105
      %s106 = sphi 0, %s103
      %s107 = sphi 0, %s106
      %s123 = sphi 0, %s107
    $region4: #{tpu_custom_call.1} parent=1 // loop_header_branch
      %20 = sbr.rel (%p18) target = $region8
    $region5: #{tpu_custom_call.1} parent=1 // loop_body
      %s22 = ssub.s32 %s17, 1
      %s23 = ssub.s32 %s17, 2
      %s30 = sadd.s32 1, %s25
      %p31 = scmp.ge.s32.totalorder %s30, 1
      %s32 = scalar_select %p31, 0, %s30
      %s33 = sadd.s32 1, %s24
      %s34 = scalar_select %p31, %s33, %s24
      %p35 = scmp.ge.s32.totalorder %s34, 2
      %s36 = scalar_select %p35, 0, %s34
      %s37 = sadd.s32 %s24, %s25
      %p38 = scmp.lt.s32.totalorder %s37, 0
      %s39 = scalar_select %p38, %s37, 0
      %s40 = sadd.s32 %s36, %s32
      %p41 = scmp.lt.s32.totalorder %s40, 0
      %s42 = scalar_select %p41, %s40, 0
      %s43 = ssub.s32 %s39, %s42
      %p44 = scmp.eq.s32.totalorder %s43, 0
      %s46 = sadd.s32 %s45, 1
      %s47 = scalar_select %p44, %s45, %s46
      %p50 = pneg %p44
      %p51 = scmp.eq.s32.totalorder %s17, 1
      %p52 = por %p50, %p51
      %p53 = scmp.ne.s32.totalorder %s45, %s48
      %p54 = scmp.eq.s32.totalorder %s17, 0
      %p55 = por %p53, %p54
      %p56 = scmp.ne.s32.totalorder %s45, %s48
      %p57 = scmp.eq.s32.totalorder %s22, 1
      %p58 = por %p56, %p57
      %p59 = scmp.ne.s32.totalorder %s48, %s49
      %p60 = scmp.eq.s32.totalorder %s22, 0
      %p61 = por %p59, %p60
      %p62 = scmp.ne.s32.totalorder %s48, %s49
      %p63 = scmp.eq.s32.totalorder %s23, 1
      %p64 = por %p62, %p63
      %p66 = scmp.ne.s32.totalorder %s49, %s65
      %p67 = scmp.eq.s32.totalorder %s23, 0
      %p68 = por %p66, %p67
      %s69 = sadd.s32 %s24, %s25
      %p70 = scmp.lt.s32.totalorder %s69, 0
      %s71 = scalar_select %p70, %s69, 0
      %s72 = sadd.s32 %s36, %s32
      %p73 = scmp.lt.s32.totalorder %s72, 0
      %s74 = scalar_select %p73, %s72, 0
      %s75 = ssub.s32 %s71, %s74
      %p76 = scmp.eq.s32.totalorder %s75, 0
      %s78 = sadd.s32 %s77, 1
      %s79 = scalar_select %p76, %s77, %s78
      %p82 = pneg %p76
      %p83 = scmp.eq.s32.totalorder %s17, 1
      %p84 = por %p82, %p83
      %p85 = scmp.ne.s32.totalorder %s77, %s80
      %p86 = scmp.eq.s32.totalorder %s17, 0
      %p87 = por %p85, %p86
      %p88 = scmp.ne.s32.totalorder %s77, %s80
      %p89 = scmp.eq.s32.totalorder %s22, 1
      %p90 = por %p88, %p89
      %p91 = scmp.ne.s32.totalorder %s80, %s81
      %p92 = scmp.eq.s32.totalorder %s22, 0
      %p93 = por %p91, %p92
      %p94 = scmp.ne.s32.totalorder %s80, %s81
      %p95 = scmp.eq.s32.totalorder %s23, 1
      %p96 = por %p94, %p95
      %p98 = scmp.ne.s32.totalorder %s81, %s97
      %p99 = scmp.eq.s32.totalorder %s23, 0
      %p100 = por %p98, %p99
      %s101 = ssub.s32 %s24, %s36
      %p102 = scmp.eq.s32.totalorder %s101, 0
      %s104 = sadd.s32 %s103, 1
      %s105 = scalar_select %p102, %s103, %s104
      %p108 = pneg %p102
      %p109 = scmp.eq.s32.totalorder %s17, 1
      %p110 = por %p108, %p109
      %p111 = scmp.ne.s32.totalorder %s103, %s106
      %p112 = scmp.eq.s32.totalorder %s17, 0
      %p113 = por %p111, %p112
      %p114 = scmp.ne.s32.totalorder %s103, %s106
      %p115 = scmp.eq.s32.totalorder %s22, 1
      %p116 = por %p114, %p115
      %p117 = scmp.ne.s32.totalorder %s106, %s107
      %p118 = scmp.eq.s32.totalorder %s22, 0
      %p119 = por %p117, %p118
      %p120 = scmp.ne.s32.totalorder %s106, %s107
      %p121 = scmp.eq.s32.totalorder %s23, 1
      %p122 = por %p120, %p121
      %p124 = scmp.ne.s32.totalorder %s107, %s123
      %p125 = scmp.eq.s32.totalorder %s23, 0
      %p126 = por %p124, %p125
      %p127 = scmp.le.s32.totalorder 1, %s17
      %p128 = scmp.lt.s32.totalorder %s17, 3
      %p129 = pnand %p127, %p128
      %p130 = pneg %p129
      // Predicated region
      $region9: #{tpu_custom_call.1} parent=5 // pred_check
        _
      $region10: #{tpu_custom_call.1} parent=5 // pred_check_branch
        %132 = sbr.rel (%p129) target = $region12
      $region11: #{tpu_custom_call.1} parent=5 // pred_region
        %s133 = ssub.s32 %s17, 1
      $region12: #{tpu_custom_call.1} parent=5 // pred_fallthru
        _
      %p134 = scmp.lt.s32.totalorder %s17, 2
      // Predicated region
      $region13: #{tpu_custom_call.1} parent=5 // pred_check
        %p135 = pneg %p134
      $region14: #{tpu_custom_call.1} parent=5 // pred_check_branch
        %137 = sbr.rel (%p135) target = $region16
      $region15: #{tpu_custom_call.1} parent=5 // pred_region
        // Predicated region
        $region17: #{tpu_custom_call.1} parent=15 // pred_check
          %p138 = pneg %p55
        $region18: #{tpu_custom_call.1} parent=15 // pred_check_branch
          %140 = sbr.rel (%p138) target = $region20
        $region19: #{tpu_custom_call.1} parent=15 // pred_region
          %s141 = sand.u32 %s45, 1
          %s142 = scalar_lea.sflag [#allocation3], %s141
          %s143 = sand.u32 %s45, 1
          %s144 = smul.addr %s143, 512
          %s145 = scalar_lea.vmem [#allocation2], %s144
          %s146 = sadd.s32 %s24, %s25
          %p147 = scmp.lt.s32.totalorder %s146, 0
          %s148 = scalar_select %p147, %s146, 0
          %s149 = smul.u32 64, %s148
          %s151 = ssub.s32 8192, 8192
          %152 = vsyncadd %s142, %s151
          %s153 = smul.addr %s149, 128
          %s154 = scalar_lea.hbm %s0, %s153
          %s155 = sshll.u32 %s145, 4
          %s156 = int_to_ptr.vmem [resolvable:$true] %s155
          %161 = dma.hbm_to_vmem [thread:$0]  %s154, 8192, %s156, %s142, 128, 128, 8
        $region20: #{tpu_custom_call.1} parent=15 // pred_fallthru
          _
        // Predicated region
        $region21: #{tpu_custom_call.1} parent=15 // pred_check
          %p162 = pneg %p87
        $region22: #{tpu_custom_call.1} parent=15 // pred_check_branch
          %164 = sbr.rel (%p162) target = $region24
        $region23: #{tpu_custom_call.1} parent=15 // pred_region
          %s165 = sand.u32 %s77, 1
          %s166 = scalar_lea.sflag [#allocation6], %s165
          %s167 = sand.u32 %s77, 1
          %s168 = smul.addr %s167, 512
          %s169 = scalar_lea.vmem [#allocation5], %s168
          %s170 = sadd.s32 %s24, %s25
          %p171 = scmp.lt.s32.totalorder %s170, 0
          %s172 = scalar_select %p171, %s170, 0
          %s173 = smul.u32 64, %s172
          %s175 = ssub.s32 8192, 8192
          %176 = vsyncadd %s166, %s175
          %s177 = smul.addr %s173, 128
          %s178 = scalar_lea.hbm %s1, %s177
          %s179 = sshll.u32 %s169, 4
          %s180 = int_to_ptr.vmem [resolvable:$true] %s179
          %185 = dma.hbm_to_vmem [thread:$0]  %s178, 8192, %s180, %s166, 128, 128, 8
        $region24: #{tpu_custom_call.1} parent=15 // pred_fallthru
          _
      $region16: #{tpu_custom_call.1} parent=5 // pred_fallthru
        _
      %p186 = scmp.le.s32.totalorder 1, %s17
      %p187 = scmp.lt.s32.totalorder %s17, 3
      %p188 = pnand %p186, %p187
      %p189 = pneg %p188
      // Predicated region
      $region25: #{tpu_custom_call.1} parent=5 // pred_check
        _
      $region26: #{tpu_custom_call.1} parent=5 // pred_check_branch
        %191 = sbr.rel (%p188) target = $region28
      $region27: #{tpu_custom_call.1} parent=5 // pred_region
        %s192 = ssub.s32 %s17, 1
        %s193 = sand.u32 %s48, 1
        %s194 = scalar_lea.sflag [#allocation3], %s193
        %s195 = sand.u32 %s48, 1
        %s196 = smul.addr %s195, 512
        %s197 = scalar_lea.vmem [#allocation2], %s196
        // Predicated region
        $region29: #{tpu_custom_call.1} parent=27 // pred_check
          %p198 = pneg %p61
        $region30: #{tpu_custom_call.1} parent=27 // pred_check_branch
          %200 = sbr.rel (%p198) target = $region32
        $region31: #{tpu_custom_call.1} parent=27 // pred_region
          %201 = dma.done %s194, 8192
        $region32: #{tpu_custom_call.1} parent=27 // pred_fallthru
          _
        %s202 = sand.u32 %s80, 1
        %s203 = scalar_lea.sflag [#allocation6], %s202
        %s204 = sand.u32 %s80, 1
        %s205 = smul.addr %s204, 512
        %s206 = scalar_lea.vmem [#allocation5], %s205
        // Predicated region
        $region33: #{tpu_custom_call.1} parent=27 // pred_check
          %p207 = pneg %p93
        $region34: #{tpu_custom_call.1} parent=27 // pred_check_branch
          %209 = sbr.rel (%p207) target = $region36
        $region35: #{tpu_custom_call.1} parent=27 // pred_region
          %210 = dma.done %s203, 8192
        $region36: #{tpu_custom_call.1} parent=27 // pred_fallthru
          _
        %s211 = sand.u32 %s48, 1
        %s212 = scalar_lea.sflag [#allocation3], %s211
        %s213 = sand.u32 %s48, 1
        %s214 = smul.addr %s213, 512
        %s215 = scalar_lea.vmem [#allocation2], %s214
        %p216 = pneg %p61
        %p217 = pneg %p58
        %s218 = sand.u32 %s80, 1
        %s219 = scalar_lea.sflag [#allocation6], %s218
        %s220 = sand.u32 %s80, 1
        %s221 = smul.addr %s220, 512
        %s222 = scalar_lea.vmem [#allocation5], %s221
        %p223 = pneg %p93
        %p224 = pneg %p90
        %p225 = pneg %p119
        %p226 = pneg %p116
        %s227 = sand.u32 %s106, 1
        %s228 = scalar_lea.sflag [#allocation4], %s227
        %s229 = sand.u32 %s106, 1
        %s230 = smul.addr %s229, 8
        %s231 = scalar_lea.vmem [#allocation7], %s230
        %s232 = sadd.s32 %s26, %s27
        %p233 = scmp.lt.s32.totalorder %s232, 0
        %s234 = scalar_select %p233, %s232, 0
        %s235 = smul.u32 64, %s234
        %s236 = sadd.s32 %s26, %s27
        %p237 = scmp.lt.s32.totalorder %s236, 0
        %s238 = scalar_select %p237, %s236, 0
        %s239 = smul.u32 64, %s238
        %s240 = sadd.s32 %s26, %s27
        %s241 = smul.u32 %s240, 512
        %s242 = ssub.s32 512, %s241
        %p243 = scmp.eq.s32.totalorder %s27, 0
        // Predicated region
        $region37: #{tpu_custom_call.1} parent=27 // pred_check
          %p244 = pneg %p243
        $region38: #{tpu_custom_call.1} parent=27 // pred_check_branch
          %246 = sbr.rel (%p244) target = $region40
        $region39: #{tpu_custom_call.1} parent=27 // pred_region
          %247 = vst [vmem:[%s231] sm:$0xff] 0.0
        $region40: #{tpu_custom_call.1} parent=27 // pred_fallthru
          _
        %p248 = scmp.ge.s32.totalorder %s242, 512
        // Predicated region
        $region41: #{tpu_custom_call.1} parent=27 // pred_check
          %p249 = pneg %p248
        $region42: #{tpu_custom_call.1} parent=27 // pred_check_branch
          %251 = sbr.rel (%p249) target = $region44
        $region43: #{tpu_custom_call.1} parent=27 // pred_region
          %v252 = vld [vmem:[%s197] sm:$0xff]
          %v253 = vld [vmem:[%s197 + $0x8] sm:$0xff]
          %v254 = vld [vmem:[%s197 + $0x10] sm:$0xff]
          %v255 = vld [vmem:[%s197 + $0x18] sm:$0xff]
          %v256 = vld [vmem:[%s197 + $0x20] sm:$0xff]
          %v257 = vld [vmem:[%s197 + $0x28] sm:$0xff]
          %v258 = vld [vmem:[%s197 + $0x30] sm:$0xff]
          %v259 = vld [vmem:[%s197 + $0x38] sm:$0xff]
          %v260 = vld [vmem:[%s197 + $0x40] sm:$0xff]
          %v261 = vld [vmem:[%s197 + $0x48] sm:$0xff]
          %v262 = vld [vmem:[%s197 + $0x50] sm:$0xff]
          %v263 = vld [vmem:[%s197 + $0x58] sm:$0xff]
          %v264 = vld [vmem:[%s197 + $0x60] sm:$0xff]
          %v265 = vld [vmem:[%s197 + $0x68] sm:$0xff]
          %v266 = vld [vmem:[%s197 + $0x70] sm:$0xff]
          %v267 = vld [vmem:[%s197 + $0x78] sm:$0xff]
          %v268 = vld [vmem:[%s197 + $0x80] sm:$0xff]
          %v269 = vld [vmem:[%s197 + $0x88] sm:$0xff]
          %v270 = vld [vmem:[%s197 + $0x90] sm:$0xff]
          %v271 = vld [vmem:[%s197 + $0x98] sm:$0xff]
          %v272 = vld [vmem:[%s197 + $0xa0] sm:$0xff]
          %v273 = vld [vmem:[%s197 + $0xa8] sm:$0xff]
          %v274 = vld [vmem:[%s197 + $0xb0] sm:$0xff]
          %v275 = vld [vmem:[%s197 + $0xb8] sm:$0xff]
          %v276 = vld [vmem:[%s197 + $0xc0] sm:$0xff]
          %v277 = vld [vmem:[%s197 + $0xc8] sm:$0xff]
          %v278 = vld [vmem:[%s197 + $0xd0] sm:$0xff]
          %v279 = vld [vmem:[%s197 + $0xd8] sm:$0xff]
          %v280 = vld [vmem:[%s197 + $0xe0] sm:$0xff]
          %v281 = vld [vmem:[%s197 + $0xe8] sm:$0xff]
          %v282 = vld [vmem:[%s197 + $0xf0] sm:$0xff]
          %v283 = vld [vmem:[%s197 + $0xf8] sm:$0xff]
          %v284 = vld [vmem:[%s197 + $0x100] sm:$0xff]
          %v285 = vld [vmem:[%s197 + $0x108] sm:$0xff]
          %v286 = vld [vmem:[%s197 + $0x110] sm:$0xff]
          %v287 = vld [vmem:[%s197 + $0x118] sm:$0xff]
          %v288 = vld [vmem:[%s197 + $0x120] sm:$0xff]
          %v289 = vld [vmem:[%s197 + $0x128] sm:$0xff]
          %v290 = vld [vmem:[%s197 + $0x130] sm:$0xff]
          %v291 = vld [vmem:[%s197 + $0x138] sm:$0xff]
          %v292 = vld [vmem:[%s197 + $0x140] sm:$0xff]
          %v293 = vld [vmem:[%s197 + $0x148] sm:$0xff]
          %v294 = vld [vmem:[%s197 + $0x150] sm:$0xff]
          %v295 = vld [vmem:[%s197 + $0x158] sm:$0xff]
          %v296 = vld [vmem:[%s197 + $0x160] sm:$0xff]
          %v297 = vld [vmem:[%s197 + $0x168] sm:$0xff]
          %v298 = vld [vmem:[%s197 + $0x170] sm:$0xff]
          %v299 = vld [vmem:[%s197 + $0x178] sm:$0xff]
          %v300 = vld [vmem:[%s197 + $0x180] sm:$0xff]
          %v301 = vld [vmem:[%s197 + $0x188] sm:$0xff]
          %v302 = vld [vmem:[%s197 + $0x190] sm:$0xff]
          %v303 = vld [vmem:[%s197 + $0x198] sm:$0xff]
          %v304 = vld [vmem:[%s197 + $0x1a0] sm:$0xff]
          %v305 = vld [vmem:[%s197 + $0x1a8] sm:$0xff]
          %v306 = vld [vmem:[%s197 + $0x1b0] sm:$0xff]
          %v307 = vld [vmem:[%s197 + $0x1b8] sm:$0xff]
          %v308 = vld [vmem:[%s197 + $0x1c0] sm:$0xff]
          %v309 = vld [vmem:[%s197 + $0x1c8] sm:$0xff]
          %v310 = vld [vmem:[%s197 + $0x1d0] sm:$0xff]
          %v311 = vld [vmem:[%s197 + $0x1d8] sm:$0xff]
          %v312 = vld [vmem:[%s197 + $0x1e0] sm:$0xff]
          %v313 = vld [vmem:[%s197 + $0x1e8] sm:$0xff]
          %v314 = vld [vmem:[%s197 + $0x1f0] sm:$0xff]
          %v315 = vld [vmem:[%s197 + $0x1f8] sm:$0xff]
          %v316 = vld [vmem:[%s206] sm:$0xff]
          %v317 = vld [vmem:[%s206 + $0x8] sm:$0xff]
          %v318 = vld [vmem:[%s206 + $0x10] sm:$0xff]
          %v319 = vld [vmem:[%s206 + $0x18] sm:$0xff]
          %v320 = vld [vmem:[%s206 + $0x20] sm:$0xff]
          %v321 = vld [vmem:[%s206 + $0x28] sm:$0xff]
          %v322 = vld [vmem:[%s206 + $0x30] sm:$0xff]
          %v323 = vld [vmem:[%s206 + $0x38] sm:$0xff]
          %v324 = vld [vmem:[%s206 + $0x40] sm:$0xff]
          %v325 = vld [vmem:[%s206 + $0x48] sm:$0xff]
          %v326 = vld [vmem:[%s206 + $0x50] sm:$0xff]
          %v327 = vld [vmem:[%s206 + $0x58] sm:$0xff]
          %v328 = vld [vmem:[%s206 + $0x60] sm:$0xff]
          %v329 = vld [vmem:[%s206 + $0x68] sm:$0xff]
          %v330 = vld [vmem:[%s206 + $0x70] sm:$0xff]
          %v331 = vld [vmem:[%s206 + $0x78] sm:$0xff]
          %v332 = vld [vmem:[%s206 + $0x80] sm:$0xff]
          %v333 = vld [vmem:[%s206 + $0x88] sm:$0xff]
          %v334 = vld [vmem:[%s206 + $0x90] sm:$0xff]
          %v335 = vld [vmem:[%s206 + $0x98] sm:$0xff]
          %v336 = vld [vmem:[%s206 + $0xa0] sm:$0xff]
          %v337 = vld [vmem:[%s206 + $0xa8] sm:$0xff]
          %v338 = vld [vmem:[%s206 + $0xb0] sm:$0xff]
          %v339 = vld [vmem:[%s206 + $0xb8] sm:$0xff]
          %v340 = vld [vmem:[%s206 + $0xc0] sm:$0xff]
          %v341 = vld [vmem:[%s206 + $0xc8] sm:$0xff]
          %v342 = vld [vmem:[%s206 + $0xd0] sm:$0xff]
          %v343 = vld [vmem:[%s206 + $0xd8] sm:$0xff]
          %v344 = vld [vmem:[%s206 + $0xe0] sm:$0xff]
          %v345 = vld [vmem:[%s206 + $0xe8] sm:$0xff]
          %v346 = vld [vmem:[%s206 + $0xf0] sm:$0xff]
          %v347 = vld [vmem:[%s206 + $0xf8] sm:$0xff]
          %v348 = vld [vmem:[%s206 + $0x100] sm:$0xff]
          %v349 = vld [vmem:[%s206 + $0x108] sm:$0xff]
          %v350 = vld [vmem:[%s206 + $0x110] sm:$0xff]
          %v351 = vld [vmem:[%s206 + $0x118] sm:$0xff]
          %v352 = vld [vmem:[%s206 + $0x120] sm:$0xff]
          %v353 = vld [vmem:[%s206 + $0x128] sm:$0xff]
          %v354 = vld [vmem:[%s206 + $0x130] sm:$0xff]
          %v355 = vld [vmem:[%s206 + $0x138] sm:$0xff]
          %v356 = vld [vmem:[%s206 + $0x140] sm:$0xff]
          %v357 = vld [vmem:[%s206 + $0x148] sm:$0xff]
          %v358 = vld [vmem:[%s206 + $0x150] sm:$0xff]
          %v359 = vld [vmem:[%s206 + $0x158] sm:$0xff]
          %v360 = vld [vmem:[%s206 + $0x160] sm:$0xff]
          %v361 = vld [vmem:[%s206 + $0x168] sm:$0xff]
          %v362 = vld [vmem:[%s206 + $0x170] sm:$0xff]
          %v363 = vld [vmem:[%s206 + $0x178] sm:$0xff]
          %v364 = vld [vmem:[%s206 + $0x180] sm:$0xff]
          %v365 = vld [vmem:[%s206 + $0x188] sm:$0xff]
          %v366 = vld [vmem:[%s206 + $0x190] sm:$0xff]
          %v367 = vld [vmem:[%s206 + $0x198] sm:$0xff]
          %v368 = vld [vmem:[%s206 + $0x1a0] sm:$0xff]
          %v369 = vld [vmem:[%s206 + $0x1a8] sm:$0xff]
          %v370 = vld [vmem:[%s206 + $0x1b0] sm:$0xff]
          %v371 = vld [vmem:[%s206 + $0x1b8] sm:$0xff]
          %v372 = vld [vmem:[%s206 + $0x1c0] sm:$0xff]
          %v373 = vld [vmem:[%s206 + $0x1c8] sm:$0xff]
          %v374 = vld [vmem:[%s206 + $0x1d0] sm:$0xff]
          %v375 = vld [vmem:[%s206 + $0x1d8] sm:$0xff]
          %v376 = vld [vmem:[%s206 + $0x1e0] sm:$0xff]
          %v377 = vld [vmem:[%s206 + $0x1e8] sm:$0xff]
          %v378 = vld [vmem:[%s206 + $0x1f0] sm:$0xff]
          %v379 = vld [vmem:[%s206 + $0x1f8] sm:$0xff]
          %v380 = vmul.f32 %v316, 2.0
          %v381 = vmul.f32 %v317, 2.0
          %v382 = vmul.f32 %v318, 2.0
          %v383 = vmul.f32 %v319, 2.0
          %v384 = vmul.f32 %v320, 2.0
          %v385 = vmul.f32 %v321, 2.0
          %v386 = vmul.f32 %v322, 2.0
          %v387 = vmul.f32 %v323, 2.0
          %v388 = vmul.f32 %v324, 2.0
          %v389 = vmul.f32 %v325, 2.0
          %v390 = vmul.f32 %v326, 2.0
          %v391 = vmul.f32 %v327, 2.0
          %v392 = vmul.f32 %v328, 2.0
          %v393 = vmul.f32 %v329, 2.0
          %v394 = vmul.f32 %v330, 2.0
          %v395 = vmul.f32 %v331, 2.0
          %v396 = vmul.f32 %v332, 2.0
          %v397 = vmul.f32 %v333, 2.0
          %v398 = vmul.f32 %v334, 2.0
          %v399 = vmul.f32 %v335, 2.0
          %v400 = vmul.f32 %v336, 2.0
          %v401 = vmul.f32 %v337, 2.0
          %v402 = vmul.f32 %v338, 2.0
          %v403 = vmul.f32 %v339, 2.0
          %v404 = vmul.f32 %v340, 2.0
          %v405 = vmul.f32 %v341, 2.0
          %v406 = vmul.f32 %v342, 2.0
          %v407 = vmul.f32 %v343, 2.0
          %v408 = vmul.f32 %v344, 2.0
          %v409 = vmul.f32 %v345, 2.0
          %v410 = vmul.f32 %v346, 2.0
          %v411 = vmul.f32 %v347, 2.0
          %v412 = vmul.f32 %v348, 2.0
          %v413 = vmul.f32 %v349, 2.0
          %v414 = vmul.f32 %v350, 2.0
          %v415 = vmul.f32 %v351, 2.0
          %v416 = vmul.f32 %v352, 2.0
          %v417 = vmul.f32 %v353, 2.0
          %v418 = vmul.f32 %v354, 2.0
          %v419 = vmul.f32 %v355, 2.0
          %v420 = vmul.f32 %v356, 2.0
          %v421 = vmul.f32 %v357, 2.0
          %v422 = vmul.f32 %v358, 2.0
          %v423 = vmul.f32 %v359, 2.0
          %v424 = vmul.f32 %v360, 2.0
          %v425 = vmul.f32 %v361, 2.0
          %v426 = vmul.f32 %v362, 2.0
          %v427 = vmul.f32 %v363, 2.0
          %v428 = vmul.f32 %v364, 2.0
          %v429 = vmul.f32 %v365, 2.0
          %v430 = vmul.f32 %v366, 2.0
          %v431 = vmul.f32 %v367, 2.0
          %v432 = vmul.f32 %v368, 2.0
          %v433 = vmul.f32 %v369, 2.0
          %v434 = vmul.f32 %v370, 2.0
          %v435 = vmul.f32 %v371, 2.0
          %v436 = vmul.f32 %v372, 2.0
          %v437 = vmul.f32 %v373, 2.0
          %v438 = vmul.f32 %v374, 2.0
          %v439 = vmul.f32 %v375, 2.0
          %v440 = vmul.f32 %v376, 2.0
          %v441 = vmul.f32 %v377, 2.0
          %v442 = vmul.f32 %v378, 2.0
          %v443 = vmul.f32 %v379, 2.0
          %v444 = vsub.f32 %v380, 1.0
          %v445 = vsub.f32 %v381, 1.0
          %v446 = vsub.f32 %v382, 1.0
          %v447 = vsub.f32 %v383, 1.0
          %v448 = vsub.f32 %v384, 1.0
          %v449 = vsub.f32 %v385, 1.0
          %v450 = vsub.f32 %v386, 1.0
          %v451 = vsub.f32 %v387, 1.0
          %v452 = vsub.f32 %v388, 1.0
          %v453 = vsub.f32 %v389, 1.0
          %v454 = vsub.f32 %v390, 1.0
          %v455 = vsub.f32 %v391, 1.0
          %v456 = vsub.f32 %v392, 1.0
          %v457 = vsub.f32 %v393, 1.0
          %v458 = vsub.f32 %v394, 1.0
          %v459 = vsub.f32 %v395, 1.0
          %v460 = vsub.f32 %v396, 1.0
          %v461 = vsub.f32 %v397, 1.0
          %v462 = vsub.f32 %v398, 1.0
          %v463 = vsub.f32 %v399, 1.0
          %v464 = vsub.f32 %v400, 1.0
          %v465 = vsub.f32 %v401, 1.0
          %v466 = vsub.f32 %v402, 1.0
          %v467 = vsub.f32 %v403, 1.0
          %v468 = vsub.f32 %v404, 1.0
          %v469 = vsub.f32 %v405, 1.0
          %v470 = vsub.f32 %v406, 1.0
          %v471 = vsub.f32 %v407, 1.0
          %v472 = vsub.f32 %v408, 1.0
          %v473 = vsub.f32 %v409, 1.0
          %v474 = vsub.f32 %v410, 1.0
          %v475 = vsub.f32 %v411, 1.0
          %v476 = vsub.f32 %v412, 1.0
          %v477 = vsub.f32 %v413, 1.0
          %v478 = vsub.f32 %v414, 1.0
          %v479 = vsub.f32 %v415, 1.0
          %v480 = vsub.f32 %v416, 1.0
          %v481 = vsub.f32 %v417, 1.0
          %v482 = vsub.f32 %v418, 1.0
          %v483 = vsub.f32 %v419, 1.0
          %v484 = vsub.f32 %v420, 1.0
          %v485 = vsub.f32 %v421, 1.0
          %v486 = vsub.f32 %v422, 1.0
          %v487 = vsub.f32 %v423, 1.0
          %v488 = vsub.f32 %v424, 1.0
          %v489 = vsub.f32 %v425, 1.0
          %v490 = vsub.f32 %v426, 1.0
          %v491 = vsub.f32 %v427, 1.0
          %v492 = vsub.f32 %v428, 1.0
          %v493 = vsub.f32 %v429, 1.0
          %v494 = vsub.f32 %v430, 1.0
          %v495 = vsub.f32 %v431, 1.0
          %v496 = vsub.f32 %v432, 1.0
          %v497 = vsub.f32 %v433, 1.0
          %v498 = vsub.f32 %v434, 1.0
          %v499 = vsub.f32 %v435, 1.0
          %v500 = vsub.f32 %v436, 1.0
          %v501 = vsub.f32 %v437, 1.0
          %v502 = vsub.f32 %v438, 1.0
          %v503 = vsub.f32 %v439, 1.0
          %v504 = vsub.f32 %v440, 1.0
          %v505 = vsub.f32 %v441, 1.0
          %v506 = vsub.f32 %v442, 1.0
          %v507 = vsub.f32 %v443, 1.0
          %v508 = vmul.f32 %v252, %v444
          %v509 = vmul.f32 %v253, %v445
          %v510 = vmul.f32 %v254, %v446
          %v511 = vmul.f32 %v255, %v447
          %v512 = vmul.f32 %v256, %v448
          %v513 = vmul.f32 %v257, %v449
          %v514 = vmul.f32 %v258, %v450
          %v515 = vmul.f32 %v259, %v451
          %v516 = vmul.f32 %v260, %v452
          %v517 = vmul.f32 %v261, %v453
          %v518 = vmul.f32 %v262, %v454
          %v519 = vmul.f32 %v263, %v455
          %v520 = vmul.f32 %v264, %v456
          %v521 = vmul.f32 %v265, %v457
          %v522 = vmul.f32 %v266, %v458
          %v523 = vmul.f32 %v267, %v459
          %v524 = vmul.f32 %v268, %v460
          %v525 = vmul.f32 %v269, %v461
          %v526 = vmul.f32 %v270, %v462
          %v527 = vmul.f32 %v271, %v463
          %v528 = vmul.f32 %v272, %v464
          %v529 = vmul.f32 %v273, %v465
          %v530 = vmul.f32 %v274, %v466
          %v531 = vmul.f32 %v275, %v467
          %v532 = vmul.f32 %v276, %v468
          %v533 = vmul.f32 %v277, %v469
          %v534 = vmul.f32 %v278, %v470
          %v535 = vmul.f32 %v279, %v471
          %v536 = vmul.f32 %v280, %v472
          %v537 = vmul.f32 %v281, %v473
          %v538 = vmul.f32 %v282, %v474
          %v539 = vmul.f32 %v283, %v475
          %v540 = vmul.f32 %v284, %v476
          %v541 = vmul.f32 %v285, %v477
          %v542 = vmul.f32 %v286, %v478
          %v543 = vmul.f32 %v287, %v479
          %v544 = vmul.f32 %v288, %v480
          %v545 = vmul.f32 %v289, %v481
          %v546 = vmul.f32 %v290, %v482
          %v547 = vmul.f32 %v291, %v483
          %v548 = vmul.f32 %v292, %v484
          %v549 = vmul.f32 %v293, %v485
          %v550 = vmul.f32 %v294, %v486
          %v551 = vmul.f32 %v295, %v487
          %v552 = vmul.f32 %v296, %v488
          %v553 = vmul.f32 %v297, %v489
          %v554 = vmul.f32 %v298, %v490
          %v555 = vmul.f32 %v299, %v491
          %v556 = vmul.f32 %v300, %v492
          %v557 = vmul.f32 %v301, %v493
          %v558 = vmul.f32 %v302, %v494
          %v559 = vmul.f32 %v303, %v495
          %v560 = vmul.f32 %v304, %v496
          %v561 = vmul.f32 %v305, %v497
          %v562 = vmul.f32 %v306, %v498
          %v563 = vmul.f32 %v307, %v499
          %v564 = vmul.f32 %v308, %v500
          %v565 = vmul.f32 %v309, %v501
          %v566 = vmul.f32 %v310, %v502
          %v567 = vmul.f32 %v311, %v503
          %v568 = vmul.f32 %v312, %v504
          %v569 = vmul.f32 %v313, %v505
          %v570 = vmul.f32 %v314, %v506
          %v571 = vmul.f32 %v315, %v507
          %v572 = vsub.f32 %v508, %v316
          %v573 = vsub.f32 %v509, %v317
          %v574 = vsub.f32 %v510, %v318
          %v575 = vsub.f32 %v511, %v319
          %v576 = vsub.f32 %v512, %v320
          %v577 = vsub.f32 %v513, %v321
          %v578 = vsub.f32 %v514, %v322
          %v579 = vsub.f32 %v515, %v323
          %v580 = vsub.f32 %v516, %v324
          %v581 = vsub.f32 %v517, %v325
          %v582 = vsub.f32 %v518, %v326
          %v583 = vsub.f32 %v519, %v327
          %v584 = vsub.f32 %v520, %v328
          %v585 = vsub.f32 %v521, %v329
          %v586 = vsub.f32 %v522, %v330
          %v587 = vsub.f32 %v523, %v331
          %v588 = vsub.f32 %v524, %v332
          %v589 = vsub.f32 %v525, %v333
          %v590 = vsub.f32 %v526, %v334
          %v591 = vsub.f32 %v527, %v335
          %v592 = vsub.f32 %v528, %v336
          %v593 = vsub.f32 %v529, %v337
          %v594 = vsub.f32 %v530, %v338
          %v595 = vsub.f32 %v531, %v339
          %v596 = vsub.f32 %v532, %v340
          %v597 = vsub.f32 %v533, %v341
          %v598 = vsub.f32 %v534, %v342
          %v599 = vsub.f32 %v535, %v343
          %v600 = vsub.f32 %v536, %v344
          %v601 = vsub.f32 %v537, %v345
          %v602 = vsub.f32 %v538, %v346
          %v603 = vsub.f32 %v539, %v347
          %v604 = vsub.f32 %v540, %v348
          %v605 = vsub.f32 %v541, %v349
          %v606 = vsub.f32 %v542, %v350
          %v607 = vsub.f32 %v543, %v351
          %v608 = vsub.f32 %v544, %v352
          %v609 = vsub.f32 %v545, %v353
          %v610 = vsub.f32 %v546, %v354
          %v611 = vsub.f32 %v547, %v355
          %v612 = vsub.f32 %v548, %v356
          %v613 = vsub.f32 %v549, %v357
          %v614 = vsub.f32 %v550, %v358
          %v615 = vsub.f32 %v551, %v359
          %v616 = vsub.f32 %v552, %v360
          %v617 = vsub.f32 %v553, %v361
          %v618 = vsub.f32 %v554, %v362
          %v619 = vsub.f32 %v555, %v363
          %v620 = vsub.f32 %v556, %v364
          %v621 = vsub.f32 %v557, %v365
          %v622 = vsub.f32 %v558, %v366
          %v623 = vsub.f32 %v559, %v367
          %v624 = vsub.f32 %v560, %v368
          %v625 = vsub.f32 %v561, %v369
          %v626 = vsub.f32 %v562, %v370
          %v627 = vsub.f32 %v563, %v371
          %v628 = vsub.f32 %v564, %v372
          %v629 = vsub.f32 %v565, %v373
          %v630 = vsub.f32 %v566, %v374
          %v631 = vsub.f32 %v567, %v375
          %v632 = vsub.f32 %v568, %v376
          %v633 = vsub.f32 %v569, %v377
          %v634 = vsub.f32 %v570, %v378
          %v635 = vsub.f32 %v571, %v379
          %v636 = vld [vmem:[%s231] sm:$0xff]
          %v637 = vadd.f32 %v572, %v573
          %v638 = vadd.f32 %v637, %v574
          %v639 = vadd.f32 %v638, %v575
          %v640 = vadd.f32 %v639, %v576
          %v641 = vadd.f32 %v640, %v577
          %v642 = vadd.f32 %v641, %v578
          %v643 = vadd.f32 %v642, %v579
          %v644 = vadd.f32 %v643, %v580
          %v645 = vadd.f32 %v644, %v581
          %v646 = vadd.f32 %v645, %v582
          %v647 = vadd.f32 %v646, %v583
          %v648 = vadd.f32 %v647, %v584
          %v649 = vadd.f32 %v648, %v585
          %v650 = vadd.f32 %v649, %v586
          %v651 = vadd.f32 %v650, %v587
          %v652 = vadd.f32 %v651, %v588
          %v653 = vadd.f32 %v652, %v589
          %v654 = vadd.f32 %v653, %v590
          %v655 = vadd.f32 %v654, %v591
          %v656 = vadd.f32 %v655, %v592
          %v657 = vadd.f32 %v656, %v593
          %v658 = vadd.f32 %v657, %v594
          %v659 = vadd.f32 %v658, %v595
          %v660 = vadd.f32 %v659, %v596
          %v661 = vadd.f32 %v660, %v597
          %v662 = vadd.f32 %v661, %v598
          %v663 = vadd.f32 %v662, %v599
          %v664 = vadd.f32 %v663, %v600
          %v665 = vadd.f32 %v664, %v601
          %v666 = vadd.f32 %v665, %v602
          %v667 = vadd.f32 %v666, %v603
          %v668 = vadd.f32 %v667, %v604
          %v669 = vadd.f32 %v668, %v605
          %v670 = vadd.f32 %v669, %v606
          %v671 = vadd.f32 %v670, %v607
          %v672 = vadd.f32 %v671, %v608
          %v673 = vadd.f32 %v672, %v609
          %v674 = vadd.f32 %v673, %v610
          %v675 = vadd.f32 %v674, %v611
          %v676 = vadd.f32 %v675, %v612
          %v677 = vadd.f32 %v676, %v613
          %v678 = vadd.f32 %v677, %v614
          %v679 = vadd.f32 %v678, %v615
          %v680 = vadd.f32 %v679, %v616
          %v681 = vadd.f32 %v680, %v617
          %v682 = vadd.f32 %v681, %v618
          %v683 = vadd.f32 %v682, %v619
          %v684 = vadd.f32 %v683, %v620
          %v685 = vadd.f32 %v684, %v621
          %v686 = vadd.f32 %v685, %v622
          %v687 = vadd.f32 %v686, %v623
          %v688 = vadd.f32 %v687, %v624
          %v689 = vadd.f32 %v688, %v625
          %v690 = vadd.f32 %v689, %v626
          %v691 = vadd.f32 %v690, %v627
          %v692 = vadd.f32 %v691, %v628
          %v693 = vadd.f32 %v692, %v629
          %v694 = vadd.f32 %v693, %v630
          %v695 = vadd.f32 %v694, %v631
          %v696 = vadd.f32 %v695, %v632
          %v697 = vadd.f32 %v696, %v633
          %v698 = vadd.f32 %v697, %v634
          %v699 = vadd.f32 %v698, %v635
          %v700 = vadd.f32 %v636, %v699
          %701 = vst [vmem:[%s231] sm:$0xff] %v700
        $region44: #{tpu_custom_call.1} parent=27 // pred_fallthru
          _
        %p702 = scmp.lt.s32.totalorder %s242, 512
        // Predicated region
        $region45: #{tpu_custom_call.1} parent=27 // pred_check
          %p703 = pneg %p702
        $region46: #{tpu_custom_call.1} parent=27 // pred_check_branch
          %705 = sbr.rel (%p703) target = $region48
        $region47: #{tpu_custom_call.1} parent=27 // pred_region
          %v706 = vld [vmem:[%s197] sm:$0xff]
          %v707 = vld [vmem:[%s197 + $0x8] sm:$0xff]
          %v708 = vld [vmem:[%s197 + $0x10] sm:$0xff]
          %v709 = vld [vmem:[%s197 + $0x18] sm:$0xff]
          %v710 = vld [vmem:[%s197 + $0x20] sm:$0xff]
          %v711 = vld [vmem:[%s197 + $0x28] sm:$0xff]
          %v712 = vld [vmem:[%s197 + $0x30] sm:$0xff]
          %v713 = vld [vmem:[%s197 + $0x38] sm:$0xff]
          %v714 = vld [vmem:[%s197 + $0x40] sm:$0xff]
          %v715 = vld [vmem:[%s197 + $0x48] sm:$0xff]
          %v716 = vld [vmem:[%s197 + $0x50] sm:$0xff]
          %v717 = vld [vmem:[%s197 + $0x58] sm:$0xff]
          %v718 = vld [vmem:[%s197 + $0x60] sm:$0xff]
          %v719 = vld [vmem:[%s197 + $0x68] sm:$0xff]
          %v720 = vld [vmem:[%s197 + $0x70] sm:$0xff]
          %v721 = vld [vmem:[%s197 + $0x78] sm:$0xff]
          %v722 = vld [vmem:[%s197 + $0x80] sm:$0xff]
          %v723 = vld [vmem:[%s197 + $0x88] sm:$0xff]
          %v724 = vld [vmem:[%s197 + $0x90] sm:$0xff]
          %v725 = vld [vmem:[%s197 + $0x98] sm:$0xff]
          %v726 = vld [vmem:[%s197 + $0xa0] sm:$0xff]
          %v727 = vld [vmem:[%s197 + $0xa8] sm:$0xff]
          %v728 = vld [vmem:[%s197 + $0xb0] sm:$0xff]
          %v729 = vld [vmem:[%s197 + $0xb8] sm:$0xff]
          %v730 = vld [vmem:[%s197 + $0xc0] sm:$0xff]
          %v731 = vld [vmem:[%s197 + $0xc8] sm:$0xff]
          %v732 = vld [vmem:[%s197 + $0xd0] sm:$0xff]
          %v733 = vld [vmem:[%s197 + $0xd8] sm:$0xff]
          %v734 = vld [vmem:[%s197 + $0xe0] sm:$0xff]
          %v735 = vld [vmem:[%s197 + $0xe8] sm:$0xff]
          %v736 = vld [vmem:[%s197 + $0xf0] sm:$0xff]
          %v737 = vld [vmem:[%s197 + $0xf8] sm:$0xff]
          %v738 = vld [vmem:[%s197 + $0x100] sm:$0xff]
          %v739 = vld [vmem:[%s197 + $0x108] sm:$0xff]
          %v740 = vld [vmem:[%s197 + $0x110] sm:$0xff]
          %v741 = vld [vmem:[%s197 + $0x118] sm:$0xff]
          %v742 = vld [vmem:[%s197 + $0x120] sm:$0xff]
          %v743 = vld [vmem:[%s197 + $0x128] sm:$0xff]
          %v744 = vld [vmem:[%s197 + $0x130] sm:$0xff]
          %v745 = vld [vmem:[%s197 + $0x138] sm:$0xff]
          %v746 = vld [vmem:[%s197 + $0x140] sm:$0xff]
          %v747 = vld [vmem:[%s197 + $0x148] sm:$0xff]
          %v748 = vld [vmem:[%s197 + $0x150] sm:$0xff]
          %v749 = vld [vmem:[%s197 + $0x158] sm:$0xff]
          %v750 = vld [vmem:[%s197 + $0x160] sm:$0xff]
          %v751 = vld [vmem:[%s197 + $0x168] sm:$0xff]
          %v752 = vld [vmem:[%s197 + $0x170] sm:$0xff]
          %v753 = vld [vmem:[%s197 + $0x178] sm:$0xff]
          %v754 = vld [vmem:[%s197 + $0x180] sm:$0xff]
          %v755 = vld [vmem:[%s197 + $0x188] sm:$0xff]
          %v756 = vld [vmem:[%s197 + $0x190] sm:$0xff]
          %v757 = vld [vmem:[%s197 + $0x198] sm:$0xff]
          %v758 = vld [vmem:[%s197 + $0x1a0] sm:$0xff]
          %v759 = vld [vmem:[%s197 + $0x1a8] sm:$0xff]
          %v760 = vld [vmem:[%s197 + $0x1b0] sm:$0xff]
          %v761 = vld [vmem:[%s197 + $0x1b8] sm:$0xff]
          %v762 = vld [vmem:[%s197 + $0x1c0] sm:$0xff]
          %v763 = vld [vmem:[%s197 + $0x1c8] sm:$0xff]
          %v764 = vld [vmem:[%s197 + $0x1d0] sm:$0xff]
          %v765 = vld [vmem:[%s197 + $0x1d8] sm:$0xff]
          %v766 = vld [vmem:[%s197 + $0x1e0] sm:$0xff]
          %v767 = vld [vmem:[%s197 + $0x1e8] sm:$0xff]
          %v768 = vld [vmem:[%s197 + $0x1f0] sm:$0xff]
          %v769 = vld [vmem:[%s197 + $0x1f8] sm:$0xff]
          %v770 = vld [vmem:[%s206] sm:$0xff]
          %v771 = vld [vmem:[%s206 + $0x8] sm:$0xff]
          %v772 = vld [vmem:[%s206 + $0x10] sm:$0xff]
          %v773 = vld [vmem:[%s206 + $0x18] sm:$0xff]
          %v774 = vld [vmem:[%s206 + $0x20] sm:$0xff]
          %v775 = vld [vmem:[%s206 + $0x28] sm:$0xff]
          %v776 = vld [vmem:[%s206 + $0x30] sm:$0xff]
          %v777 = vld [vmem:[%s206 + $0x38] sm:$0xff]
          %v778 = vld [vmem:[%s206 + $0x40] sm:$0xff]
          %v779 = vld [vmem:[%s206 + $0x48] sm:$0xff]
          %v780 = vld [vmem:[%s206 + $0x50] sm:$0xff]
          %v781 = vld [vmem:[%s206 + $0x58] sm:$0xff]
          %v782 = vld [vmem:[%s206 + $0x60] sm:$0xff]
          %v783 = vld [vmem:[%s206 + $0x68] sm:$0xff]
          %v784 = vld [vmem:[%s206 + $0x70] sm:$0xff]
          %v785 = vld [vmem:[%s206 + $0x78] sm:$0xff]
          %v786 = vld [vmem:[%s206 + $0x80] sm:$0xff]
          %v787 = vld [vmem:[%s206 + $0x88] sm:$0xff]
          %v788 = vld [vmem:[%s206 + $0x90] sm:$0xff]
          %v789 = vld [vmem:[%s206 + $0x98] sm:$0xff]
          %v790 = vld [vmem:[%s206 + $0xa0] sm:$0xff]
          %v791 = vld [vmem:[%s206 + $0xa8] sm:$0xff]
          %v792 = vld [vmem:[%s206 + $0xb0] sm:$0xff]
          %v793 = vld [vmem:[%s206 + $0xb8] sm:$0xff]
          %v794 = vld [vmem:[%s206 + $0xc0] sm:$0xff]
          %v795 = vld [vmem:[%s206 + $0xc8] sm:$0xff]
          %v796 = vld [vmem:[%s206 + $0xd0] sm:$0xff]
          %v797 = vld [vmem:[%s206 + $0xd8] sm:$0xff]
          %v798 = vld [vmem:[%s206 + $0xe0] sm:$0xff]
          %v799 = vld [vmem:[%s206 + $0xe8] sm:$0xff]
          %v800 = vld [vmem:[%s206 + $0xf0] sm:$0xff]
          %v801 = vld [vmem:[%s206 + $0xf8] sm:$0xff]
          %v802 = vld [vmem:[%s206 + $0x100] sm:$0xff]
          %v803 = vld [vmem:[%s206 + $0x108] sm:$0xff]
          %v804 = vld [vmem:[%s206 + $0x110] sm:$0xff]
          %v805 = vld [vmem:[%s206 + $0x118] sm:$0xff]
          %v806 = vld [vmem:[%s206 + $0x120] sm:$0xff]
          %v807 = vld [vmem:[%s206 + $0x128] sm:$0xff]
          %v808 = vld [vmem:[%s206 + $0x130] sm:$0xff]
          %v809 = vld [vmem:[%s206 + $0x138] sm:$0xff]
          %v810 = vld [vmem:[%s206 + $0x140] sm:$0xff]
          %v811 = vld [vmem:[%s206 + $0x148] sm:$0xff]
          %v812 = vld [vmem:[%s206 + $0x150] sm:$0xff]
          %v813 = vld [vmem:[%s206 + $0x158] sm:$0xff]
          %v814 = vld [vmem:[%s206 + $0x160] sm:$0xff]
          %v815 = vld [vmem:[%s206 + $0x168] sm:$0xff]
          %v816 = vld [vmem:[%s206 + $0x170] sm:$0xff]
          %v817 = vld [vmem:[%s206 + $0x178] sm:$0xff]
          %v818 = vld [vmem:[%s206 + $0x180] sm:$0xff]
          %v819 = vld [vmem:[%s206 + $0x188] sm:$0xff]
          %v820 = vld [vmem:[%s206 + $0x190] sm:$0xff]
          %v821 = vld [vmem:[%s206 + $0x198] sm:$0xff]
          %v822 = vld [vmem:[%s206 + $0x1a0] sm:$0xff]
          %v823 = vld [vmem:[%s206 + $0x1a8] sm:$0xff]
          %v824 = vld [vmem:[%s206 + $0x1b0] sm:$0xff]
          %v825 = vld [vmem:[%s206 + $0x1b8] sm:$0xff]
          %v826 = vld [vmem:[%s206 + $0x1c0] sm:$0xff]
          %v827 = vld [vmem:[%s206 + $0x1c8] sm:$0xff]
          %v828 = vld [vmem:[%s206 + $0x1d0] sm:$0xff]
          %v829 = vld [vmem:[%s206 + $0x1d8] sm:$0xff]
          %v830 = vld [vmem:[%s206 + $0x1e0] sm:$0xff]
          %v831 = vld [vmem:[%s206 + $0x1e8] sm:$0xff]
          %v832 = vld [vmem:[%s206 + $0x1f0] sm:$0xff]
          %v833 = vld [vmem:[%s206 + $0x1f8] sm:$0xff]
          %v834 = vmul.f32 %v770, 2.0
          %v835 = vmul.f32 %v771, 2.0
          %v836 = vmul.f32 %v772, 2.0
          %v837 = vmul.f32 %v773, 2.0
          %v838 = vmul.f32 %v774, 2.0
          %v839 = vmul.f32 %v775, 2.0
          %v840 = vmul.f32 %v776, 2.0
          %v841 = vmul.f32 %v777, 2.0
          %v842 = vmul.f32 %v778, 2.0
          %v843 = vmul.f32 %v779, 2.0
          %v844 = vmul.f32 %v780, 2.0
          %v845 = vmul.f32 %v781, 2.0
          %v846 = vmul.f32 %v782, 2.0
          %v847 = vmul.f32 %v783, 2.0
          %v848 = vmul.f32 %v784, 2.0
          %v849 = vmul.f32 %v785, 2.0
          %v850 = vmul.f32 %v786, 2.0
          %v851 = vmul.f32 %v787, 2.0
          %v852 = vmul.f32 %v788, 2.0
          %v853 = vmul.f32 %v789, 2.0
          %v854 = vmul.f32 %v790, 2.0
          %v855 = vmul.f32 %v791, 2.0
          %v856 = vmul.f32 %v792, 2.0
          %v857 = vmul.f32 %v793, 2.0
          %v858 = vmul.f32 %v794, 2.0
          %v859 = vmul.f32 %v795, 2.0
          %v860 = vmul.f32 %v796, 2.0
          %v861 = vmul.f32 %v797, 2.0
          %v862 = vmul.f32 %v798, 2.0
          %v863 = vmul.f32 %v799, 2.0
          %v864 = vmul.f32 %v800, 2.0
          %v865 = vmul.f32 %v801, 2.0
          %v866 = vmul.f32 %v802, 2.0
          %v867 = vmul.f32 %v803, 2.0
          %v868 = vmul.f32 %v804, 2.0
          %v869 = vmul.f32 %v805, 2.0
          %v870 = vmul.f32 %v806, 2.0
          %v871 = vmul.f32 %v807, 2.0
          %v872 = vmul.f32 %v808, 2.0
          %v873 = vmul.f32 %v809, 2.0
          %v874 = vmul.f32 %v810, 2.0
          %v875 = vmul.f32 %v811, 2.0
          %v876 = vmul.f32 %v812, 2.0
          %v877 = vmul.f32 %v813, 2.0
          %v878 = vmul.f32 %v814, 2.0
          %v879 = vmul.f32 %v815, 2.0
          %v880 = vmul.f32 %v816, 2.0
          %v881 = vmul.f32 %v817, 2.0
          %v882 = vmul.f32 %v818, 2.0
          %v883 = vmul.f32 %v819, 2.0
          %v884 = vmul.f32 %v820, 2.0
          %v885 = vmul.f32 %v821, 2.0
          %v886 = vmul.f32 %v822, 2.0
          %v887 = vmul.f32 %v823, 2.0
          %v888 = vmul.f32 %v824, 2.0
          %v889 = vmul.f32 %v825, 2.0
          %v890 = vmul.f32 %v826, 2.0
          %v891 = vmul.f32 %v827, 2.0
          %v892 = vmul.f32 %v828, 2.0
          %v893 = vmul.f32 %v829, 2.0
          %v894 = vmul.f32 %v830, 2.0
          %v895 = vmul.f32 %v831, 2.0
          %v896 = vmul.f32 %v832, 2.0
          %v897 = vmul.f32 %v833, 2.0
          %v898 = vsub.f32 %v834, 1.0
          %v899 = vsub.f32 %v835, 1.0
          %v900 = vsub.f32 %v836, 1.0
          %v901 = vsub.f32 %v837, 1.0
          %v902 = vsub.f32 %v838, 1.0
          %v903 = vsub.f32 %v839, 1.0
          %v904 = vsub.f32 %v840, 1.0
          %v905 = vsub.f32 %v841, 1.0
          %v906 = vsub.f32 %v842, 1.0
          %v907 = vsub.f32 %v843, 1.0
          %v908 = vsub.f32 %v844, 1.0
          %v909 = vsub.f32 %v845, 1.0
          %v910 = vsub.f32 %v846, 1.0
          %v911 = vsub.f32 %v847, 1.0
          %v912 = vsub.f32 %v848, 1.0
          %v913 = vsub.f32 %v849, 1.0
          %v914 = vsub.f32 %v850, 1.0
          %v915 = vsub.f32 %v851, 1.0
          %v916 = vsub.f32 %v852, 1.0
          %v917 = vsub.f32 %v853, 1.0
          %v918 = vsub.f32 %v854, 1.0
          %v919 = vsub.f32 %v855, 1.0
          %v920 = vsub.f32 %v856, 1.0
          %v921 = vsub.f32 %v857, 1.0
          %v922 = vsub.f32 %v858, 1.0
          %v923 = vsub.f32 %v859, 1.0
          %v924 = vsub.f32 %v860, 1.0
          %v925 = vsub.f32 %v861, 1.0
          %v926 = vsub.f32 %v862, 1.0
          %v927 = vsub.f32 %v863, 1.0
          %v928 = vsub.f32 %v864, 1.0
          %v929 = vsub.f32 %v865, 1.0
          %v930 = vsub.f32 %v866, 1.0
          %v931 = vsub.f32 %v867, 1.0
          %v932 = vsub.f32 %v868, 1.0
          %v933 = vsub.f32 %v869, 1.0
          %v934 = vsub.f32 %v870, 1.0
          %v935 = vsub.f32 %v871, 1.0
          %v936 = vsub.f32 %v872, 1.0
          %v937 = vsub.f32 %v873, 1.0
          %v938 = vsub.f32 %v874, 1.0
          %v939 = vsub.f32 %v875, 1.0
          %v940 = vsub.f32 %v876, 1.0
          %v941 = vsub.f32 %v877, 1.0
          %v942 = vsub.f32 %v878, 1.0
          %v943 = vsub.f32 %v879, 1.0
          %v944 = vsub.f32 %v880, 1.0
          %v945 = vsub.f32 %v881, 1.0
          %v946 = vsub.f32 %v882, 1.0
          %v947 = vsub.f32 %v883, 1.0
          %v948 = vsub.f32 %v884, 1.0
          %v949 = vsub.f32 %v885, 1.0
          %v950 = vsub.f32 %v886, 1.0
          %v951 = vsub.f32 %v887, 1.0
          %v952 = vsub.f32 %v888, 1.0
          %v953 = vsub.f32 %v889, 1.0
          %v954 = vsub.f32 %v890, 1.0
          %v955 = vsub.f32 %v891, 1.0
          %v956 = vsub.f32 %v892, 1.0
          %v957 = vsub.f32 %v893, 1.0
          %v958 = vsub.f32 %v894, 1.0
          %v959 = vsub.f32 %v895, 1.0
          %v960 = vsub.f32 %v896, 1.0
          %v961 = vsub.f32 %v897, 1.0
          %v962 = vmul.f32 %v706, %v898
          %v963 = vmul.f32 %v707, %v899
          %v964 = vmul.f32 %v708, %v900
          %v965 = vmul.f32 %v709, %v901
          %v966 = vmul.f32 %v710, %v902
          %v967 = vmul.f32 %v711, %v903
          %v968 = vmul.f32 %v712, %v904
          %v969 = vmul.f32 %v713, %v905
          %v970 = vmul.f32 %v714, %v906
          %v971 = vmul.f32 %v715, %v907
          %v972 = vmul.f32 %v716, %v908
          %v973 = vmul.f32 %v717, %v909
          %v974 = vmul.f32 %v718, %v910
          %v975 = vmul.f32 %v719, %v911
          %v976 = vmul.f32 %v720, %v912
          %v977 = vmul.f32 %v721, %v913
          %v978 = vmul.f32 %v722, %v914
          %v979 = vmul.f32 %v723, %v915
          %v980 = vmul.f32 %v724, %v916
          %v981 = vmul.f32 %v725, %v917
          %v982 = vmul.f32 %v726, %v918
          %v983 = vmul.f32 %v727, %v919
          %v984 = vmul.f32 %v728, %v920
          %v985 = vmul.f32 %v729, %v921
          %v986 = vmul.f32 %v730, %v922
          %v987 = vmul.f32 %v731, %v923
          %v988 = vmul.f32 %v732, %v924
          %v989 = vmul.f32 %v733, %v925
          %v990 = vmul.f32 %v734, %v926
          %v991 = vmul.f32 %v735, %v927
          %v992 = vmul.f32 %v736, %v928
          %v993 = vmul.f32 %v737, %v929
          %v994 = vmul.f32 %v738, %v930
          %v995 = vmul.f32 %v739, %v931
          %v996 = vmul.f32 %v740, %v932
          %v997 = vmul.f32 %v741, %v933
          %v998 = vmul.f32 %v742, %v934
          %v999 = vmul.f32 %v743, %v935
          %v1000 = vmul.f32 %v744, %v936
          %v1001 = vmul.f32 %v745, %v937
          %v1002 = vmul.f32 %v746, %v938
          %v1003 = vmul.f32 %v747, %v939
          %v1004 = vmul.f32 %v748, %v940
          %v1005 = vmul.f32 %v749, %v941
          %v1006 = vmul.f32 %v750, %v942
          %v1007 = vmul.f32 %v751, %v943
          %v1008 = vmul.f32 %v752, %v944
          %v1009 = vmul.f32 %v753, %v945
          %v1010 = vmul.f32 %v754, %v946
          %v1011 = vmul.f32 %v755, %v947
          %v1012 = vmul.f32 %v756, %v948
          %v1013 = vmul.f32 %v757, %v949
          %v1014 = vmul.f32 %v758, %v950
          %v1015 = vmul.f32 %v759, %v951
          %v1016 = vmul.f32 %v760, %v952
          %v1017 = vmul.f32 %v761, %v953
          %v1018 = vmul.f32 %v762, %v954
          %v1019 = vmul.f32 %v763, %v955
          %v1020 = vmul.f32 %v764, %v956
          %v1021 = vmul.f32 %v765, %v957
          %v1022 = vmul.f32 %v766, %v958
          %v1023 = vmul.f32 %v767, %v959
          %v1024 = vmul.f32 %v768, %v960
          %v1025 = vmul.f32 %v769, %v961
          %v1026 = vsub.f32 %v962, %v770
          %v1027 = vsub.f32 %v963, %v771
          %v1028 = vsub.f32 %v964, %v772
          %v1029 = vsub.f32 %v965, %v773
          %v1030 = vsub.f32 %v966, %v774
          %v1031 = vsub.f32 %v967, %v775
          %v1032 = vsub.f32 %v968, %v776
          %v1033 = vsub.f32 %v969, %v777
          %v1034 = vsub.f32 %v970, %v778
          %v1035 = vsub.f32 %v971, %v779
          %v1036 = vsub.f32 %v972, %v780
          %v1037 = vsub.f32 %v973, %v781
          %v1038 = vsub.f32 %v974, %v782
          %v1039 = vsub.f32 %v975, %v783
          %v1040 = vsub.f32 %v976, %v784
          %v1041 = vsub.f32 %v977, %v785
          %v1042 = vsub.f32 %v978, %v786
          %v1043 = vsub.f32 %v979, %v787
          %v1044 = vsub.f32 %v980, %v788
          %v1045 = vsub.f32 %v981, %v789
          %v1046 = vsub.f32 %v982, %v790
          %v1047 = vsub.f32 %v983, %v791
          %v1048 = vsub.f32 %v984, %v792
          %v1049 = vsub.f32 %v985, %v793
          %v1050 = vsub.f32 %v986, %v794
          %v1051 = vsub.f32 %v987, %v795
          %v1052 = vsub.f32 %v988, %v796
          %v1053 = vsub.f32 %v989, %v797
          %v1054 = vsub.f32 %v990, %v798
          %v1055 = vsub.f32 %v991, %v799
          %v1056 = vsub.f32 %v992, %v800
          %v1057 = vsub.f32 %v993, %v801
          %v1058 = vsub.f32 %v994, %v802
          %v1059 = vsub.f32 %v995, %v803
          %v1060 = vsub.f32 %v996, %v804
          %v1061 = vsub.f32 %v997, %v805
          %v1062 = vsub.f32 %v998, %v806
          %v1063 = vsub.f32 %v999, %v807
          %v1064 = vsub.f32 %v1000, %v808
          %v1065 = vsub.f32 %v1001, %v809
          %v1066 = vsub.f32 %v1002, %v810
          %v1067 = vsub.f32 %v1003, %v811
          %v1068 = vsub.f32 %v1004, %v812
          %v1069 = vsub.f32 %v1005, %v813
          %v1070 = vsub.f32 %v1006, %v814
          %v1071 = vsub.f32 %v1007, %v815
          %v1072 = vsub.f32 %v1008, %v816
          %v1073 = vsub.f32 %v1009, %v817
          %v1074 = vsub.f32 %v1010, %v818
          %v1075 = vsub.f32 %v1011, %v819
          %v1076 = vsub.f32 %v1012, %v820
          %v1077 = vsub.f32 %v1013, %v821
          %v1078 = vsub.f32 %v1014, %v822
          %v1079 = vsub.f32 %v1015, %v823
          %v1080 = vsub.f32 %v1016, %v824
          %v1081 = vsub.f32 %v1017, %v825
          %v1082 = vsub.f32 %v1018, %v826
          %v1083 = vsub.f32 %v1019, %v827
          %v1084 = vsub.f32 %v1020, %v828
          %v1085 = vsub.f32 %v1021, %v829
          %v1086 = vsub.f32 %v1022, %v830
          %v1087 = vsub.f32 %v1023, %v831
          %v1088 = vsub.f32 %v1024, %v832
          %v1089 = vsub.f32 %v1025, %v833
          %s1090 = ssub.s32 %s242, 0
          %v1091 = vlaneseq
          %v1092 = vshrl.u32 %v1091, 7
          %v1093 = vadd.s32 %v1092, 8
          %v1094 = vadd.s32 %v1092, 16
          %v1095 = vadd.s32 %v1092, 24
          %v1096 = vadd.s32 %v1092, 32
          %v1097 = vadd.s32 %v1092, 40
          %v1098 = vadd.s32 %v1092, 48
          %v1099 = vadd.s32 %v1092, 56
          %v1100 = vadd.s32 %v1092, 64
          %v1101 = vadd.s32 %v1092, 72
          %v1102 = vadd.s32 %v1092, 80
          %v1103 = vadd.s32 %v1092, 88
          %v1104 = vadd.s32 %v1092, 96
          %v1105 = vadd.s32 %v1092, 104
          %v1106 = vadd.s32 %v1092, 112
          %v1107 = vadd.s32 %v1092, 120
          %v1108 = vadd.s32 %v1092, 128
          %v1109 = vadd.s32 %v1092, 136
          %v1110 = vadd.s32 %v1092, 144
          %v1111 = vadd.s32 %v1092, 152
          %v1112 = vadd.s32 %v1092, 160
          %v1113 = vadd.s32 %v1092, 168
          %v1114 = vadd.s32 %v1092, 176
          %v1115 = vadd.s32 %v1092, 184
          %v1116 = vadd.s32 %v1092, 192
          %v1117 = vadd.s32 %v1092, 200
          %v1118 = vadd.s32 %v1092, 208
          %v1119 = vadd.s32 %v1092, 216
          %v1120 = vadd.s32 %v1092, 224
          %v1121 = vadd.s32 %v1092, 232
          %v1122 = vadd.s32 %v1092, 240
          %v1123 = vadd.s32 %v1092, 248
          %v1124 = vadd.s32 %v1092, 256
          %v1125 = vadd.s32 %v1092, 264
          %v1126 = vadd.s32 %v1092, 272
          %v1127 = vadd.s32 %v1092, 280
          %v1128 = vadd.s32 %v1092, 288
          %v1129 = vadd.s32 %v1092, 296
          %v1130 = vadd.s32 %v1092, 304
          %v1131 = vadd.s32 %v1092, 312
          %v1132 = vadd.s32 %v1092, 320
          %v1133 = vadd.s32 %v1092, 328
          %v1134 = vadd.s32 %v1092, 336
          %v1135 = vadd.s32 %v1092, 344
          %v1136 = vadd.s32 %v1092, 352
          %v1137 = vadd.s32 %v1092, 360
          %v1138 = vadd.s32 %v1092, 368
          %v1139 = vadd.s32 %v1092, 376
          %v1140 = vadd.s32 %v1092, 384
          %v1141 = vadd.s32 %v1092, 392
          %v1142 = vadd.s32 %v1092, 400
          %v1143 = vadd.s32 %v1092, 408
          %v1144 = vadd.s32 %v1092, 416
          %v1145 = vadd.s32 %v1092, 424
          %v1146 = vadd.s32 %v1092, 432
          %v1147 = vadd.s32 %v1092, 440
          %v1148 = vadd.s32 %v1092, 448
          %v1149 = vadd.s32 %v1092, 456
          %v1150 = vadd.s32 %v1092, 464
          %v1151 = vadd.s32 %v1092, 472
          %v1152 = vadd.s32 %v1092, 480
          %v1153 = vadd.s32 %v1092, 488
          %v1154 = vadd.s32 %v1092, 496
          %v1155 = vadd.s32 %v1092, 504
          %v1156 = vstv %s1090
          %vm1157 = vcmp.lt.s32.totalorder %v1092, %v1156
          %vm1158 = vcmp.lt.s32.totalorder %v1093, %v1156
          %vm1159 = vcmp.lt.s32.totalorder %v1094, %v1156
          %vm1160 = vcmp.lt.s32.totalorder %v1095, %v1156
          %vm1161 = vcmp.lt.s32.totalorder %v1096, %v1156
          %vm1162 = vcmp.lt.s32.totalorder %v1097, %v1156
          %vm1163 = vcmp.lt.s32.totalorder %v1098, %v1156
          %vm1164 = vcmp.lt.s32.totalorder %v1099, %v1156
          %vm1165 = vcmp.lt.s32.totalorder %v1100, %v1156
          %vm1166 = vcmp.lt.s32.totalorder %v1101, %v1156
          %vm1167 = vcmp.lt.s32.totalorder %v1102, %v1156
          %vm1168 = vcmp.lt.s32.totalorder %v1103, %v1156
          %vm1169 = vcmp.lt.s32.totalorder %v1104, %v1156
          %vm1170 = vcmp.lt.s32.totalorder %v1105, %v1156
          %vm1171 = vcmp.lt.s32.totalorder %v1106, %v1156
          %vm1172 = vcmp.lt.s32.totalorder %v1107, %v1156
          %vm1173 = vcmp.lt.s32.totalorder %v1108, %v1156
          %vm1174 = vcmp.lt.s32.totalorder %v1109, %v1156
          %vm1175 = vcmp.lt.s32.totalorder %v1110, %v1156
          %vm1176 = vcmp.lt.s32.totalorder %v1111, %v1156
          %vm1177 = vcmp.lt.s32.totalorder %v1112, %v1156
          %vm1178 = vcmp.lt.s32.totalorder %v1113, %v1156
          %vm1179 = vcmp.lt.s32.totalorder %v1114, %v1156
          %vm1180 = vcmp.lt.s32.totalorder %v1115, %v1156
          %vm1181 = vcmp.lt.s32.totalorder %v1116, %v1156
          %vm1182 = vcmp.lt.s32.totalorder %v1117, %v1156
          %vm1183 = vcmp.lt.s32.totalorder %v1118, %v1156
          %vm1184 = vcmp.lt.s32.totalorder %v1119, %v1156
          %vm1185 = vcmp.lt.s32.totalorder %v1120, %v1156
          %vm1186 = vcmp.lt.s32.totalorder %v1121, %v1156
          %vm1187 = vcmp.lt.s32.totalorder %v1122, %v1156
          %vm1188 = vcmp.lt.s32.totalorder %v1123, %v1156
          %vm1189 = vcmp.lt.s32.totalorder %v1124, %v1156
          %vm1190 = vcmp.lt.s32.totalorder %v1125, %v1156
          %vm1191 = vcmp.lt.s32.totalorder %v1126, %v1156
          %vm1192 = vcmp.lt.s32.totalorder %v1127, %v1156
          %vm1193 = vcmp.lt.s32.totalorder %v1128, %v1156
          %vm1194 = vcmp.lt.s32.totalorder %v1129, %v1156
          %vm1195 = vcmp.lt.s32.totalorder %v1130, %v1156
          %vm1196 = vcmp.lt.s32.totalorder %v1131, %v1156
          %vm1197 = vcmp.lt.s32.totalorder %v1132, %v1156
          %vm1198 = vcmp.lt.s32.totalorder %v1133, %v1156
          %vm1199 = vcmp.lt.s32.totalorder %v1134, %v1156
          %vm1200 = vcmp.lt.s32.totalorder %v1135, %v1156
          %vm1201 = vcmp.lt.s32.totalorder %v1136, %v1156
          %vm1202 = vcmp.lt.s32.totalorder %v1137, %v1156
          %vm1203 = vcmp.lt.s32.totalorder %v1138, %v1156
          %vm1204 = vcmp.lt.s32.totalorder %v1139, %v1156
          %vm1205 = vcmp.lt.s32.totalorder %v1140, %v1156
          %vm1206 = vcmp.lt.s32.totalorder %v1141, %v1156
          %vm1207 = vcmp.lt.s32.totalorder %v1142, %v1156
          %vm1208 = vcmp.lt.s32.totalorder %v1143, %v1156
          %vm1209 = vcmp.lt.s32.totalorder %v1144, %v1156
          %vm1210 = vcmp.lt.s32.totalorder %v1145, %v1156
          %vm1211 = vcmp.lt.s32.totalorder %v1146, %v1156
          %vm1212 = vcmp.lt.s32.totalorder %v1147, %v1156
          %vm1213 = vcmp.lt.s32.totalorder %v1148, %v1156
          %vm1214 = vcmp.lt.s32.totalorder %v1149, %v1156
          %vm1215 = vcmp.lt.s32.totalorder %v1150, %v1156
          %vm1216 = vcmp.lt.s32.totalorder %v1151, %v1156
          %vm1217 = vcmp.lt.s32.totalorder %v1152, %v1156
          %vm1218 = vcmp.lt.s32.totalorder %v1153, %v1156
          %vm1219 = vcmp.lt.s32.totalorder %v1154, %v1156
          %vm1220 = vcmp.lt.s32.totalorder %v1155, %v1156
          %v1221 = vsel %vm1157, %v1026, 0.0
          %v1222 = vsel %vm1158, %v1027, 0.0
          %v1223 = vsel %vm1159, %v1028, 0.0
          %v1224 = vsel %vm1160, %v1029, 0.0
          %v1225 = vsel %vm1161, %v1030, 0.0
          %v1226 = vsel %vm1162, %v1031, 0.0
          %v1227 = vsel %vm1163, %v1032, 0.0
          %v1228 = vsel %vm1164, %v1033, 0.0
          %v1229 = vsel %vm1165, %v1034, 0.0
          %v1230 = vsel %vm1166, %v1035, 0.0
          %v1231 = vsel %vm1167, %v1036, 0.0
          %v1232 = vsel %vm1168, %v1037, 0.0
          %v1233 = vsel %vm1169, %v1038, 0.0
          %v1234 = vsel %vm1170, %v1039, 0.0
          %v1235 = vsel %vm1171, %v1040, 0.0
          %v1236 = vsel %vm1172, %v1041, 0.0
          %v1237 = vsel %vm1173, %v1042, 0.0
          %v1238 = vsel %vm1174, %v1043, 0.0
          %v1239 = vsel %vm1175, %v1044, 0.0
          %v1240 = vsel %vm1176, %v1045, 0.0
          %v1241 = vsel %vm1177, %v1046, 0.0
          %v1242 = vsel %vm1178, %v1047, 0.0
          %v1243 = vsel %vm1179, %v1048, 0.0
          %v1244 = vsel %vm1180, %v1049, 0.0
          %v1245 = vsel %vm1181, %v1050, 0.0
          %v1246 = vsel %vm1182, %v1051, 0.0
          %v1247 = vsel %vm1183, %v1052, 0.0
          %v1248 = vsel %vm1184, %v1053, 0.0
          %v1249 = vsel %vm1185, %v1054, 0.0
          %v1250 = vsel %vm1186, %v1055, 0.0
          %v1251 = vsel %vm1187, %v1056, 0.0
          %v1252 = vsel %vm1188, %v1057, 0.0
          %v1253 = vsel %vm1189, %v1058, 0.0
          %v1254 = vsel %vm1190, %v1059, 0.0
          %v1255 = vsel %vm1191, %v1060, 0.0
          %v1256 = vsel %vm1192, %v1061, 0.0
          %v1257 = vsel %vm1193, %v1062, 0.0
          %v1258 = vsel %vm1194, %v1063, 0.0
          %v1259 = vsel %vm1195, %v1064, 0.0
          %v1260 = vsel %vm1196, %v1065, 0.0
          %v1261 = vsel %vm1197, %v1066, 0.0
          %v1262 = vsel %vm1198, %v1067, 0.0
          %v1263 = vsel %vm1199, %v1068, 0.0
          %v1264 = vsel %vm1200, %v1069, 0.0
          %v1265 = vsel %vm1201, %v1070, 0.0
          %v1266 = vsel %vm1202, %v1071, 0.0
          %v1267 = vsel %vm1203, %v1072, 0.0
          %v1268 = vsel %vm1204, %v1073, 0.0
          %v1269 = vsel %vm1205, %v1074, 0.0
          %v1270 = vsel %vm1206, %v1075, 0.0
          %v1271 = vsel %vm1207, %v1076, 0.0
          %v1272 = vsel %vm1208, %v1077, 0.0
          %v1273 = vsel %vm1209, %v1078, 0.0
          %v1274 = vsel %vm1210, %v1079, 0.0
          %v1275 = vsel %vm1211, %v1080, 0.0
          %v1276 = vsel %vm1212, %v1081, 0.0
          %v1277 = vsel %vm1213, %v1082, 0.0
          %v1278 = vsel %vm1214, %v1083, 0.0
          %v1279 = vsel %vm1215, %v1084, 0.0
          %v1280 = vsel %vm1216, %v1085, 0.0
          %v1281 = vsel %vm1217, %v1086, 0.0
          %v1282 = vsel %vm1218, %v1087, 0.0
          %v1283 = vsel %vm1219, %v1088, 0.0
          %v1284 = vsel %vm1220, %v1089, 0.0
          %v1285 = vld [vmem:[%s231] sm:$0xff]
          %v1286 = vadd.f32 %v1221, %v1222
          %v1287 = vadd.f32 %v1286, %v1223
          %v1288 = vadd.f32 %v1287, %v1224
          %v1289 = vadd.f32 %v1288, %v1225
          %v1290 = vadd.f32 %v1289, %v1226
          %v1291 = vadd.f32 %v1290, %v1227
          %v1292 = vadd.f32 %v1291, %v1228
          %v1293 = vadd.f32 %v1292, %v1229
          %v1294 = vadd.f32 %v1293, %v1230
          %v1295 = vadd.f32 %v1294, %v1231
          %v1296 = vadd.f32 %v1295, %v1232
          %v1297 = vadd.f32 %v1296, %v1233
          %v1298 = vadd.f32 %v1297, %v1234
          %v1299 = vadd.f32 %v1298, %v1235
          %v1300 = vadd.f32 %v1299, %v1236
          %v1301 = vadd.f32 %v1300, %v1237
          %v1302 = vadd.f32 %v1301, %v1238
          %v1303 = vadd.f32 %v1302, %v1239
          %v1304 = vadd.f32 %v1303, %v1240
          %v1305 = vadd.f32 %v1304, %v1241
          %v1306 = vadd.f32 %v1305, %v1242
          %v1307 = vadd.f32 %v1306, %v1243
          %v1308 = vadd.f32 %v1307, %v1244
          %v1309 = vadd.f32 %v1308, %v1245
          %v1310 = vadd.f32 %v1309, %v1246
          %v1311 = vadd.f32 %v1310, %v1247
          %v1312 = vadd.f32 %v1311, %v1248
          %v1313 = vadd.f32 %v1312, %v1249
          %v1314 = vadd.f32 %v1313, %v1250
          %v1315 = vadd.f32 %v1314, %v1251
          %v1316 = vadd.f32 %v1315, %v1252
          %v1317 = vadd.f32 %v1316, %v1253
          %v1318 = vadd.f32 %v1317, %v1254
          %v1319 = vadd.f32 %v1318, %v1255
          %v1320 = vadd.f32 %v1319, %v1256
          %v1321 = vadd.f32 %v1320, %v1257
          %v1322 = vadd.f32 %v1321, %v1258
          %v1323 = vadd.f32 %v1322, %v1259
          %v1324 = vadd.f32 %v1323, %v1260
          %v1325 = vadd.f32 %v1324, %v1261
          %v1326 = vadd.f32 %v1325, %v1262
          %v1327 = vadd.f32 %v1326, %v1263
          %v1328 = vadd.f32 %v1327, %v1264
          %v1329 = vadd.f32 %v1328, %v1265
          %v1330 = vadd.f32 %v1329, %v1266
          %v1331 = vadd.f32 %v1330, %v1267
          %v1332 = vadd.f32 %v1331, %v1268
          %v1333 = vadd.f32 %v1332, %v1269
          %v1334 = vadd.f32 %v1333, %v1270
          %v1335 = vadd.f32 %v1334, %v1271
          %v1336 = vadd.f32 %v1335, %v1272
          %v1337 = vadd.f32 %v1336, %v1273
          %v1338 = vadd.f32 %v1337, %v1274
          %v1339 = vadd.f32 %v1338, %v1275
          %v1340 = vadd.f32 %v1339, %v1276
          %v1341 = vadd.f32 %v1340, %v1277
          %v1342 = vadd.f32 %v1341, %v1278
          %v1343 = vadd.f32 %v1342, %v1279
          %v1344 = vadd.f32 %v1343, %v1280
          %v1345 = vadd.f32 %v1344, %v1281
          %v1346 = vadd.f32 %v1345, %v1282
          %v1347 = vadd.f32 %v1346, %v1283
          %v1348 = vadd.f32 %v1347, %v1284
          %v1349 = vadd.f32 %v1285, %v1348
          %1350 = vst [vmem:[%s231] sm:$0xff] %v1349
        $region48: #{tpu_custom_call.1} parent=27 // pred_fallthru
          _
        %s1351 = sand.u32 %s106, 1
        %s1352 = scalar_lea.sflag [#allocation4], %s1351
        %s1353 = sand.u32 %s106, 1
        %s1354 = smul.addr %s1353, 8
        %s1355 = scalar_lea.vmem [#allocation7], %s1354
        // Predicated region
        $region49: #{tpu_custom_call.1} parent=27 // pred_check
          %p1356 = pneg %p116
        $region50: #{tpu_custom_call.1} parent=27 // pred_check_branch
          %1358 = sbr.rel (%p1356) target = $region52
        $region51: #{tpu_custom_call.1} parent=27 // pred_region
          %s1360 = ssub.s32 128, 128
          %1361 = vsyncadd %s1352, %s1360
          %s1362 = smul.addr %s26, 128
          %s1363 = scalar_lea.hbm %s2, %s1362
          %s1365 = sshll.u32 %s1355, 4
          %s1366 = int_to_ptr.vmem [resolvable:$true] %s1365
          %1368 = dma.vmem_to_hbm [thread:$0]  %s1366, 128, %s1363, %s1352
        $region52: #{tpu_custom_call.1} parent=27 // pred_fallthru
          _
      $region28: #{tpu_custom_call.1} parent=5 // pred_fallthru
        _
      %p1369 = scmp.le.s32.totalorder 2, %s17
      // Predicated region
      $region53: #{tpu_custom_call.1} parent=5 // pred_check
        %p1370 = pneg %p1369
      $region54: #{tpu_custom_call.1} parent=5 // pred_check_branch
        %1372 = sbr.rel (%p1370) target = $region56
      $region55: #{tpu_custom_call.1} parent=5 // pred_region
        %s1373 = ssub.s32 %s17, 2
        // Predicated region
        $region57: #{tpu_custom_call.1} parent=55 // pred_check
          %p1374 = pneg %p122
        $region58: #{tpu_custom_call.1} parent=55 // pred_check_branch
          %1376 = sbr.rel (%p1374) target = $region60
        $region59: #{tpu_custom_call.1} parent=55 // pred_region
          %s1377 = sand.u32 %s107, 1
          %s1378 = scalar_lea.sflag [#allocation4], %s1377
          %s1379 = sand.u32 %s107, 1
          %s1380 = smul.addr %s1379, 8
          %s1381 = scalar_lea.vmem [#allocation7], %s1380
          %1382 = dma.done %s1378, 128
        $region60: #{tpu_custom_call.1} parent=55 // pred_fallthru
          _
      $region56: #{tpu_custom_call.1} parent=5 // pred_fallthru
        _
    $region6: #{tpu_custom_call.1} parent=1 // loop_footer
      %s21 = sadd.s32 1, %s17
    $region7: #{tpu_custom_call.1} parent=1 // loop_footer_branch
      %16 = sbr.rel target = $region3
    $region8: #{tpu_custom_call.1} parent=1 // loop_exit
      _
    %1383 = vsyncpa [#allocation3], 1
    %s1384 = scalar_lea.sflag [#allocation3], 1
    %1385 = vsyncpa %s1384, 1
    %1386 = vsyncpa [#allocation6], 1
    %s1387 = scalar_lea.sflag [#allocation6], 1
    %1388 = vsyncpa %s1387, 1
    %1389 = vsyncpa [#allocation4], 1
    %s1390 = scalar_lea.sflag [#allocation4], 1
    %1391 = vsyncpa %s1390, 1

</llo_original>
